<compile_context>
chip_gen: v6e
topology: v6e:2x2x1
jax: 0.10.0
libtpu: 0.0.40
codegen_flags: <defaults>
</compile_context>

<pallas_src>
import jax
import jax.numpy as jnp
from jax.experimental import pallas as pl
from jax.experimental.pallas import tpu as pltpu

_LANE = 128
_SUBLANE = 8


def _round_up(x, m):
    return (x + m - 1) // m * m


def _cdiv(a, b):
    return (a + b - 1) // b


def _vmem_capacity_bytes():
    """Physical VMEM per TensorCore; conservative 64 MiB (v7x) if it cannot be queried."""
    try:
        cap = getattr(pltpu.get_tpu_info(), "vmem_capacity_bytes", None)
        if cap:
            return int(cap)
    except Exception:
        pass
    return 64 * 1024 * 1024


def _pick_tile_m(m_rows, c_pad, out_bytes, vmem_cap):
    """Largest row tile whose pipelined footprint fits a generation-aware VMEM budget,
    capped so there are at least 2 grid steps (v7x megacore sharding)."""
    budget = int(vmem_cap * 0.45)  # ~28 MiB on v7x (64 MiB VMEM), ~57 MiB on v5e/v6e (128 MiB)
    # Per-row VMEM: bf16 x (2 bufs) + out (2 bufs) + f32 MXU result / epilogue temps (~2x f32).
    per_row = c_pad * (2 * 2 + 2 * out_bytes + 2 * 4)
    resident = c_pad * c_pad * 2 + c_pad * 4  # single-buffered bf16 weight + f32 bias
    tile = _LANE
    for tm in (2048, 1024, 512, 256, 128):
        if tm * per_row + resident <= budget:
            tile = tm
            break
    if m_rows > 2 * _LANE:
        # At least 2 balanced steps so the ("parallel",) row grid can use both v7x TensorCores.
        tile = min(tile, _round_up(_cdiv(m_rows, 2), _LANE))
    else:
        tile = min(tile, _round_up(max(m_rows, _SUBLANE), _SUBLANE))
    return max(tile, _SUBLANE)


def _bottleneck_kernel(x_ref, w_ref, bias_ref, o_ref):
    # x_ref:    (TM, Cp) bf16 tile of the flattened NHWC input (lane-dense channels)
    # w_ref:    (Cp, Cp) bf16 conv3 1x1 weight with BN3 scale pre-folded, laid out (C_in, C_out)
    # bias_ref: (1, Cp)  f32 folded BN3 bias
    x = x_ref[...]
    # 1x1 conv == per-pixel matmul over channels: bf16 operands, f32 accumulation on the MXU.
    y = jnp.dot(x, w_ref[...], preferred_element_type=jnp.float32)
    # BN3 bias (scale folded into the weight) + relu, residual add + final relu, all in f32.
    y = jnp.maximum(y + bias_ref[...], 0.0)
    out = jnp.maximum(y + x.astype(jnp.float32), 0.0)
    o_ref[...] = out.astype(o_ref.dtype)  # cast only at the store (bf16 writeback)


def bottleneck_forward_nhwc(x_nhwc, w3, bn3_gamma, bn3_beta, bn3_mean, bn3_var,
                            eps=1e-5, tile_m=None, out_dtype=jnp.bfloat16):
    """Core NHWC path. x_nhwc: (N, H, W, C). w3: (C_out=C, C_in=C) 1x1 conv weight."""
    N, H, W, C = x_nhwc.shape
    assert w3.shape == (C, C), "degenerate reference forward needs planes == in_planes"
    M = N * H * W
    Cp = _round_up(C, _LANE)
    out_bytes = jnp.dtype(out_dtype).itemsize

    vmem_cap = _vmem_capacity_bytes()
    if tile_m is None:
        tile_m = _pick_tile_m(M, Cp, out_bytes, vmem_cap)

    # Fold eval-mode BN3 into the 1x1 conv: scale into the weight, bias as a single add.
    scale = bn3_gamma.astype(jnp.float32) / jnp.sqrt(bn3_var.astype(jnp.float32) + eps)
    bias = bn3_beta.astype(jnp.float32) - bn3_mean.astype(jnp.float32) * scale
    w_t = jnp.transpose(w3, (1, 0)).astype(jnp.float32) * scale[None, :]  # (C_in, C_out)

    x_flat = x_nhwc.reshape(M, C)
    if Cp != C:
        # Only needed for toy channel counts; real ResNet C (256/512/1024/2048) skips this pass.
        x_flat = jnp.pad(x_flat, ((0, 0), (0, Cp - C)))
        w_t = jnp.pad(w_t, ((0, Cp - C), (0, Cp - C)))
        bias = jnp.pad(bias, (0, Cp - C))
    x_in = x_flat.astype(jnp.bfloat16)
    w_in = w_t.astype(jnp.bfloat16)
    bias_in = bias.reshape(1, Cp)

    grid = (pl.cdiv(M, tile_m),)  # ragged last block is masked by Pallas; no row padding pass

    # VMEM footprint: double-buffered x/out tiles, single-buffered weight+bias,
    # plus f32 MXU result / epilogue temporaries; cap below physical VMEM (v7x: < 48 MiB).
    footprint = (2 * tile_m * Cp * 2
                 + 2 * tile_m * Cp * out_bytes
                 + Cp * Cp * 2 + Cp * 4
                 + 2 * tile_m * Cp * 4)
    vmem_limit = int(min(vmem_cap * 3 // 4, max(footprint + (4 << 20), 16 << 20)))

    def launch(single_buffer_consts):
        if single_buffer_consts:
            w_spec = pl.BlockSpec((Cp, Cp), lambda i: (0, 0), pipeline_mode=pl.Buffered(1))
            b_spec = pl.BlockSpec((1, Cp), lambda i: (0, 0), pipeline_mode=pl.Buffered(1))
        else:
            w_spec = pl.BlockSpec((Cp, Cp), lambda i: (0, 0))
            b_spec = pl.BlockSpec((1, Cp), lambda i: (0, 0))
        return pl.pallas_call(
            _bottleneck_kernel,
            out_shape=jax.ShapeDtypeStruct((M, Cp), out_dtype),
            grid_spec=pltpu.PrefetchScalarGridSpec(
                num_scalar_prefetch=0,
                grid=grid,
                in_specs=[
                    pl.BlockSpec((tile_m, Cp), lambda i: (i, 0)),  # x tile (streamed)
                    w_spec,                                        # folded weight (resident)
                    b_spec,                                        # folded bias  (resident)
                ],
                out_specs=pl.BlockSpec((tile_m, Cp), lambda i: (i, 0)),
            ),
            compiler_params=pltpu.CompilerParams(
                dimension_semantics=("parallel",),
                vmem_limit_bytes=vmem_limit),
        )(x_in, w_in, bias_in)

    try:
        out = launch(True)
    except Exception:
        # Fallback for environments where pipeline_mode=pl.Buffered(1) is unsupported.
        out = launch(False)

    if Cp != C:
        out = out[:, :C]
    return out.reshape(N, H, W, C)


def bottleneck_forward(x_nchw, w3, bn3_gamma, bn3_beta, bn3_mean, bn3_var,
                       eps=1e-5, tile_m=None, out_dtype=jnp.bfloat16):
    """NCHW interface matching the PyTorch module."""
    # TODO(synk): in a full NHWC bf16 pipeline these transposes (and the bf16 cast inside
    # bottleneck_forward_nhwc) disappear; kept only for PyTorch NCHW interface parity.
    x_nhwc = jnp.transpose(x_nchw, (0, 2, 3, 1))
    out_nhwc = bottleneck_forward_nhwc(x_nhwc, w3, bn3_gamma, bn3_beta, bn3_mean, bn3_var,
                                       eps=eps, tile_m=tile_m, out_dtype=out_dtype)
    return jnp.transpose(out_nhwc, (0, 3, 1, 2))


if __name__ == "__main__":
    key = jax.random.PRNGKey(0)
    N, C, H, W = 2, 4, 16, 16            # in_planes == planes == C
    k_x, k_w, k_g, k_b, k_m, k_v = jax.random.split(key, 6)

    x = jax.random.normal(k_x, (N, C, H, W), dtype=jnp.float32)
    w3 = jax.random.normal(k_w, (C, C), dtype=jnp.float32) * 0.1   # conv3 1x1 weight (C_out, C_in)
    bn3_gamma = 1.0 + 0.1 * jax.random.normal(k_g, (C,), dtype=jnp.float32)
    bn3_beta = 0.1 * jax.random.normal(k_b, (C,), dtype=jnp.float32)
    bn3_mean = 0.1 * jax.random.normal(k_m, (C,), dtype=jnp.float32)
    bn3_var = jnp.abs(1.0 + 0.1 * jax.random.normal(k_v, (C,), dtype=jnp.float32))

    out = bottleneck_forward(x, w3, bn3_gamma, bn3_beta, bn3_mean, bn3_var)
    jax.block_until_ready(out)
    assert out.shape == (N, C, H, W) and out.dtype == jnp.bfloat16

    # Plain-JAX reference: same effective formula in f32 over the same bf16-rounded operands
    # the kernel feeds the MXU, then rounded to the kernel's bf16 output dtype.
    scale = bn3_gamma / jnp.sqrt(bn3_var + 1e-5)
    bias = bn3_beta - bn3_mean * scale
    w_ref = (w3.T * scale[None, :]).astype(jnp.bfloat16).astype(jnp.float32)   # (C_in, C_out)
    x_nhwc = jnp.transpose(x, (0, 2, 3, 1)).astype(jnp.bfloat16).astype(jnp.float32)
    y_ref = jnp.einsum('nhwc,co->nhwo', x_nhwc, w_ref) + bias
    ref_nhwc = jnp.maximum(jnp.maximum(y_ref, 0.0) + x_nhwc, 0.0)
    ref = jnp.transpose(ref_nhwc, (0, 3, 1, 2)).astype(jnp.bfloat16).astype(jnp.float32)

    err = float(jnp.max(jnp.abs(out.astype(jnp.float32) - ref)))
    assert err <= 1e-2, err
    print("KERNEL_OK")
</pallas_src>

<mosaic_0001>
module attributes {stable_mosaic.version = 11 : i64} {
  func.func @_bottleneck_kernel(%arg0: i32, %arg1: memref<256x128xbf16, #tpu.memory_space<vmem>>, %arg2: memref<128x128xbf16, #tpu.memory_space<vmem>>, %arg3: memref<1x128xf32, #tpu.memory_space<vmem>>, %arg4: memref<256x128xbf16, #tpu.memory_space<vmem>>) attributes {dimension_semantics = [#tpu.dimension_semantics<parallel>], iteration_bounds = array<i64: 2>, scalar_prefetch = 0 : i64, scratch_operands = 0 : i64, tpu.core_type = #tpu.core_type<tc>, window_params = [{transform_indices = @transform_0, window_bounds = array<i64: 256, 128>}, {pipeline_mode = #tpu.pipeline_mode<synchronous>, transform_indices = @transform_1, window_bounds = array<i64: 128, 128>}, {pipeline_mode = #tpu.pipeline_mode<synchronous>, transform_indices = @transform_2, window_bounds = array<i64: 1, 128>}, {transform_indices = @transform_3, window_bounds = array<i64: 256, 128>}]} {
    %c0 = arith.constant 0 : index
    %c0_0 = arith.constant 0 : index
    %0 = vector.load %arg1[%c0, %c0_0] : memref<256x128xbf16, #tpu.memory_space<vmem>>, vector<256x128xbf16>
    %c0_1 = arith.constant 0 : index
    %c0_2 = arith.constant 0 : index
    %1 = vector.load %arg2[%c0_1, %c0_2] : memref<128x128xbf16, #tpu.memory_space<vmem>>, vector<128x128xbf16>
    %cst = arith.constant dense<0.000000e+00> : vector<256x128xf32>
    %2 = tpu.matmul %0, %1, %cst {dimension_numbers = #tpu.dot_dimension_numbers<[1], [0], [0], [1], [0, 0, 1, 1], [], []>} : vector<256x128xbf16>, vector<128x128xbf16>, vector<256x128xf32> -> vector<256x128xf32>
    %c0_3 = arith.constant 0 : index
    %c0_4 = arith.constant 0 : index
    %3 = vector.load %arg3[%c0_3, %c0_4] : memref<1x128xf32, #tpu.memory_space<vmem>>, vector<1x128xf32>
    %4 = vector.broadcast %3 : vector<1x128xf32> to vector<256x128xf32>
    %5 = arith.addf %2, %4 : vector<256x128xf32>
    %cst_5 = arith.constant 0.000000e+00 : f32
    %6 = vector.broadcast %cst_5 : f32 to vector<256x128xf32>
    %7 = arith.maximumf %5, %6 : vector<256x128xf32>
    %8 = arith.extf %0 : vector<256x128xbf16> to vector<256x128xf32>
    %9 = arith.addf %7, %8 : vector<256x128xf32>
    %cst_6 = arith.constant 0.000000e+00 : f32
    %10 = vector.broadcast %cst_6 : f32 to vector<256x128xf32>
    %11 = arith.maximumf %9, %10 : vector<256x128xf32>
    %12 = arith.truncf %11 : vector<256x128xf32> to vector<256x128xbf16>
    %c0_7 = arith.constant 0 : index
    %c0_8 = arith.constant 0 : index
    %13 = vector.load %arg4[%c0_7, %c0_8] : memref<256x128xbf16, #tpu.memory_space<vmem>>, vector<256x128xbf16>
    tpu.vector_store %arg4[%c0_7, %c0_8], %12 {strides = array<i32>} : memref<256x128xbf16, #tpu.memory_space<vmem>>, vector<256x128xbf16>,
    return
  }
  func.func @transform_0(%arg0: i32) -> (i32, i32) {
    %c0_i32 = arith.constant 0 : i32
    %c0_i32_0 = arith.constant 0 : i32
    return %arg0, %c0_i32 : i32, i32
  }
  func.func @transform_1(%arg0: i32) -> (i32, i32) {
    %c0_i32 = arith.constant 0 : i32
    %c0_i32_0 = arith.constant 0 : i32
    %c0_i32_1 = arith.constant 0 : i32
    return %c0_i32, %c0_i32_0 : i32, i32
  }
  func.func @transform_2(%arg0: i32) -> (i32, i32) {
    %c0_i32 = arith.constant 0 : i32
    %c0_i32_0 = arith.constant 0 : i32
    %c0_i32_1 = arith.constant 0 : i32
    return %c0_i32, %c0_i32_0 : i32, i32
  }
  func.func @transform_3(%arg0: i32) -> (i32, i32) {
    %c0_i32 = arith.constant 0 : i32
    %c0_i32_0 = arith.constant 0 : i32
    return %arg0, %c0_i32 : i32, i32
  }
}

module attributes {stable_mosaic.version = 11 : i64} {
  func.func @_bottleneck_kernel(%arg0: i32, %arg1: memref<256x128xbf16, #tpu.memory_space<vmem>>, %arg2: memref<128x128xbf16, #tpu.memory_space<vmem>>, %arg3: memref<1x128xf32, #tpu.memory_space<vmem>>, %arg4: memref<256x128xbf16, #tpu.memory_space<vmem>>) attributes {dimension_semantics = [#tpu.dimension_semantics<parallel>], iteration_bounds = array<i64: 2>, scalar_prefetch = 0 : i64, scratch_operands = 0 : i64, tpu.core_type = #tpu.core_type<tc>, window_params = [{transform_indices = @transform_0, window_bounds = array<i64: 256, 128>}, {pipeline_mode = #tpu.pipeline_mode<synchronous>, transform_indices = @transform_1, window_bounds = array<i64: 128, 128>}, {pipeline_mode = #tpu.pipeline_mode<synchronous>, transform_indices = @transform_2, window_bounds = array<i64: 1, 128>}, {transform_indices = @transform_3, window_bounds = array<i64: 256, 128>}]} {
    %c0 = arith.constant 0 : index
    %c0_0 = arith.constant 0 : index
    %0 = vector.load %arg1[%c0, %c0_0] : memref<256x128xbf16, #tpu.memory_space<vmem>>, vector<256x128xbf16>
    %c0_1 = arith.constant 0 : index
    %c0_2 = arith.constant 0 : index
    %1 = vector.load %arg2[%c0_1, %c0_2] : memref<128x128xbf16, #tpu.memory_space<vmem>>, vector<128x128xbf16>
    %cst = arith.constant dense<0.000000e+00> : vector<256x128xf32>
    %2 = tpu.matmul %0, %1, %cst {dimension_numbers = #tpu.dot_dimension_numbers<[1], [0], [0], [1], [0, 0, 1, 1], [], []>} : vector<256x128xbf16>, vector<128x128xbf16>, vector<256x128xf32> -> vector<256x128xf32>
    %c0_3 = arith.constant 0 : index
    %c0_4 = arith.constant 0 : index
    %3 = vector.load %arg3[%c0_3, %c0_4] : memref<1x128xf32, #tpu.memory_space<vmem>>, vector<1x128xf32>
    %4 = vector.broadcast %3 : vector<1x128xf32> to vector<256x128xf32>
    %5 = arith.addf %2, %4 : vector<256x128xf32>
    %cst_5 = arith.constant 0.000000e+00 : f32
    %6 = vector.broadcast %cst_5 : f32 to vector<256x128xf32>
    %7 = arith.maximumf %5, %6 : vector<256x128xf32>
    %8 = arith.extf %0 : vector<256x128xbf16> to vector<256x128xf32>
    %9 = arith.addf %7, %8 : vector<256x128xf32>
    %cst_6 = arith.constant 0.000000e+00 : f32
    %10 = vector.broadcast %cst_6 : f32 to vector<256x128xf32>
    %11 = arith.maximumf %9, %10 : vector<256x128xf32>
    %12 = arith.truncf %11 : vector<256x128xf32> to vector<256x128xbf16>
    %c0_7 = arith.constant 0 : index
    %c0_8 = arith.constant 0 : index
    %13 = vector.load %arg4[%c0_7, %c0_8] : memref<256x128xbf16, #tpu.memory_space<vmem>>, vector<256x128xbf16>
    tpu.vector_store %arg4[%c0_7, %c0_8], %12 {strides = array<i32>} : memref<256x128xbf16, #tpu.memory_space<vmem>>, vector<256x128xbf16>,
    return
  }
  func.func @transform_0(%arg0: i32) -> (i32, i32) {
    %c0_i32 = arith.constant 0 : i32
    %c0_i32_0 = arith.constant 0 : i32
    return %arg0, %c0_i32 : i32, i32
  }
  func.func @transform_1(%arg0: i32) -> (i32, i32) {
    %c0_i32 = arith.constant 0 : i32
    %c0_i32_0 = arith.constant 0 : i32
    %c0_i32_1 = arith.constant 0 : i32
    return %c0_i32, %c0_i32_0 : i32, i32
  }
  func.func @transform_2(%arg0: i32) -> (i32, i32) {
    %c0_i32 = arith.constant 0 : i32
    %c0_i32_0 = arith.constant 0 : i32
    %c0_i32_1 = arith.constant 0 : i32
    return %c0_i32, %c0_i32_0 : i32, i32
  }
  func.func @transform_3(%arg0: i32) -> (i32, i32) {
    %c0_i32 = arith.constant 0 : i32
    %c0_i32_0 = arith.constant 0 : i32
    return %arg0, %c0_i32 : i32, i32
  }
}

</mosaic_0001>

<llo_original>
// kernel: tpu_custom_call.1
$region0: #{tpu_custom_call.1}
  #allocation0 [shape = 'u32[]', space=smem, size = 0x4, offset = 0x4, fixed_abs, tag = 'smem constant byte address 0x4 - core index']
  #allocation1 [shape = 'u32[144,128]{1,0:T(1,128)}', space=vmem, size = 0x12000, scoped, tag = 'internal scratch']
  %s0 = inlined_call_operand.hbm [shape: bf16[512,128], index: 0, kind: input, shape index: {}]
  %s1 = inlined_call_operand.hbm [shape: bf16[128,128], index: 1, kind: input, shape index: {}]
  %s2 = inlined_call_operand.vmem [shape: f32[1,128], index: 2, kind: input, shape index: {}]
  %s3 = inlined_call_operand.hbm [shape: bf16[512,128], index: 3, kind: output, shape index: {}]
  %s4 = sld [smem:[#allocation0]]
  $region53: #{tpu_custom_call.1} parent=0
    _
  %s6 = ssub.s32 1, %s4
  %s7 = scalar_select 0, %s6, %s4
  $region1: #{tpu_custom_call.1} parent=0
    #allocation2 [shape = 'u8[131072]{0}', space=vmem, size = 0x20000, scoped, tag = 'input window, operand 0']
    #allocation3 [shape = 's32[2]{0}', space=sflag, size = 0x8, scoped, tag = 'scoped memory for tpu_custom_call.1']
    #allocation4 [shape = 's32[2]{0}', space=sflag, size = 0x8, scoped, tag = 'scoped memory for tpu_custom_call.1']
    #allocation5 [shape = 'u8[32768]{0}', space=vmem, size = 0x8000, scoped, tag = 'input window, operand 1, single buffered']
    #allocation6 [shape = 's32[1]{0}', space=sflag, size = 0x4, scoped, tag = 'scoped memory for tpu_custom_call.1']
    #allocation7 [shape = 'u8[131072]{0}', space=vmem, size = 0x20000, scoped, tag = 'output window, operand 0']
    %8 = vsyncpa [#allocation3], 0
    %s9 = scalar_lea.sflag [#allocation3], 1
    %10 = vsyncpa %s9, 0
    %11 = vsyncpa [#allocation6], 0
    %12 = vsyncpa [#allocation4], 0
    %s13 = scalar_lea.sflag [#allocation4], 1
    %14 = vsyncpa %s13, 0
    loop: start=0, step=1, limit=4
    $region2: #{tpu_custom_call.1} parent=1 // loop_pre_header
      _
    $region3: #{tpu_custom_call.1} parent=1 // loop_header
      %s16 = sphi 0, %s20
      %p17 = scmp.ge.s32.totalorder %s16, 4
      %s26 = sphi 0, %s28
      %s29 = sphi 0, %s26
      %s30 = sphi 0, %s29
      %s46 = sphi 0, %s30
      %s50 = sphi 0, %s50
      %s52 = sphi 0, %s50
      %s53 = sphi 0, %s52
      %s67 = sphi 0, %s53
      %s71 = sphi 0, %s71
      %s73 = sphi 0, %s71
      %s74 = sphi 0, %s73
      %s88 = sphi 0, %s74
      %s94 = sphi 0, %s96
      %s97 = sphi 0, %s94
      %s98 = sphi 0, %s97
      %s114 = sphi 0, %s98
    $region4: #{tpu_custom_call.1} parent=1 // loop_header_branch
      %19 = sbr.rel (%p17) target = $region8
    $region5: #{tpu_custom_call.1} parent=1 // loop_body
      %s21 = ssub.s32 %s16, 1
      %s22 = ssub.s32 %s16, 2
      %s23 = sadd.s32 %s16, 1
      %s24 = ssub.s32 %s16, %s23
      %p25 = scmp.eq.s32.totalorder %s24, 0
      %s27 = sadd.s32 %s26, 1
      %s28 = scalar_select %p25, %s26, %s27
      %p31 = pneg %p25
      %p32 = scmp.eq.s32.totalorder %s16, 1
      %p33 = por %p31, %p32
      %p34 = scmp.ne.s32.totalorder %s26, %s29
      %p35 = scmp.eq.s32.totalorder %s16, 0
      %p36 = por %p34, %p35
      %p37 = scmp.ne.s32.totalorder %s26, %s29
      %p38 = scmp.eq.s32.totalorder %s21, 1
      %p39 = por %p37, %p38
      %p40 = scmp.ne.s32.totalorder %s29, %s30
      %p41 = scmp.eq.s32.totalorder %s21, 0
      %p42 = por %p40, %p41
      %p43 = scmp.ne.s32.totalorder %s29, %s30
      %p44 = scmp.eq.s32.totalorder %s22, 1
      %p45 = por %p43, %p44
      %p47 = scmp.ne.s32.totalorder %s30, %s46
      %p48 = scmp.eq.s32.totalorder %s22, 0
      %p49 = por %p47, %p48
      %s51 = sadd.s32 %s50, 1
      %p54 = scmp.eq.s32.totalorder %s16, 1
      %p55 = scmp.ne.s32.totalorder %s50, %s52
      %p56 = scmp.eq.s32.totalorder %s16, 0
      %p57 = por %p55, %p56
      %p58 = scmp.ne.s32.totalorder %s50, %s52
      %p59 = scmp.eq.s32.totalorder %s21, 1
      %p60 = por %p58, %p59
      %p61 = scmp.ne.s32.totalorder %s52, %s53
      %p62 = scmp.eq.s32.totalorder %s21, 0
      %p63 = por %p61, %p62
      %p64 = scmp.ne.s32.totalorder %s52, %s53
      %p65 = scmp.eq.s32.totalorder %s22, 1
      %p66 = por %p64, %p65
      %p68 = scmp.ne.s32.totalorder %s53, %s67
      %p69 = scmp.eq.s32.totalorder %s22, 0
      %p70 = por %p68, %p69
      %s72 = sadd.s32 %s71, 1
      %p75 = scmp.eq.s32.totalorder %s16, 1
      %p76 = scmp.ne.s32.totalorder %s71, %s73
      %p77 = scmp.eq.s32.totalorder %s16, 0
      %p78 = por %p76, %p77
      %p79 = scmp.ne.s32.totalorder %s71, %s73
      %p80 = scmp.eq.s32.totalorder %s21, 1
      %p81 = por %p79, %p80
      %p82 = scmp.ne.s32.totalorder %s73, %s74
      %p83 = scmp.eq.s32.totalorder %s21, 0
      %p84 = por %p82, %p83
      %p85 = scmp.ne.s32.totalorder %s73, %s74
      %p86 = scmp.eq.s32.totalorder %s22, 1
      %p87 = por %p85, %p86
      %p89 = scmp.ne.s32.totalorder %s74, %s88
      %p90 = scmp.eq.s32.totalorder %s22, 0
      %p91 = por %p89, %p90
      %s92 = ssub.s32 %s16, %s23
      %p93 = scmp.eq.s32.totalorder %s92, 0
      %s95 = sadd.s32 %s94, 1
      %s96 = scalar_select %p93, %s94, %s95
      %p99 = pneg %p93
      %p100 = scmp.eq.s32.totalorder %s16, 1
      %p101 = por %p99, %p100
      %p102 = scmp.ne.s32.totalorder %s94, %s97
      %p103 = scmp.eq.s32.totalorder %s16, 0
      %p104 = por %p102, %p103
      %p105 = scmp.ne.s32.totalorder %s94, %s97
      %p106 = scmp.eq.s32.totalorder %s21, 1
      %p107 = por %p105, %p106
      %p108 = scmp.ne.s32.totalorder %s97, %s98
      %p109 = scmp.eq.s32.totalorder %s21, 0
      %p110 = por %p108, %p109
      %p111 = scmp.ne.s32.totalorder %s97, %s98
      %p112 = scmp.eq.s32.totalorder %s22, 1
      %p113 = por %p111, %p112
      %p115 = scmp.ne.s32.totalorder %s98, %s114
      %p116 = scmp.eq.s32.totalorder %s22, 0
      %p117 = por %p115, %p116
      %p118 = scmp.le.s32.totalorder 1, %s16
      %p119 = scmp.lt.s32.totalorder %s16, 3
      %p120 = pnand %p118, %p119
      %p121 = pneg %p120
      // Predicated region
      $region9: #{tpu_custom_call.1} parent=5 // pred_check
        _
      $region10: #{tpu_custom_call.1} parent=5 // pred_check_branch
        %123 = sbr.rel (%p120) target = $region12
      $region11: #{tpu_custom_call.1} parent=5 // pred_region
        %s124 = ssub.s32 %s16, 1
        // Predicated region
        $region13: #{tpu_custom_call.1} parent=11 // pred_check
          %p125 = pneg %p63
        $region14: #{tpu_custom_call.1} parent=11 // pred_check_branch
          %127 = sbr.rel (%p125) target = $region16
        $region15: #{tpu_custom_call.1} parent=11 // pred_region
          %s129 = ssub.s32 1024, 1024
          %130 = vsyncadd [#allocation6], %s129
          %s131 = sshll.u32 [#allocation5], 4
          %s132 = int_to_ptr.vmem [resolvable:$true] %s131
          %137 = dma.hbm_to_vmem [thread:$0]  %s1, 1024, %s132, [#allocation6], 64, 64, 4
        $region16: #{tpu_custom_call.1} parent=11 // pred_fallthru
          _
        // Predicated region
        $region17: #{tpu_custom_call.1} parent=11 // pred_check
          %p138 = pneg %p84
        $region18: #{tpu_custom_call.1} parent=11 // pred_check_branch
          %140 = sbr.rel (%p138) target = $region20
        $region19: #{tpu_custom_call.1} parent=11 // pred_region
          _
        $region20: #{tpu_custom_call.1} parent=11 // pred_fallthru
          _
      $region12: #{tpu_custom_call.1} parent=5 // pred_fallthru
        _
      %p141 = scmp.lt.s32.totalorder %s16, 2
      // Predicated region
      $region21: #{tpu_custom_call.1} parent=5 // pred_check
        %p142 = pneg %p141
      $region22: #{tpu_custom_call.1} parent=5 // pred_check_branch
        %144 = sbr.rel (%p142) target = $region24
      $region23: #{tpu_custom_call.1} parent=5 // pred_region
        // Predicated region
        $region25: #{tpu_custom_call.1} parent=23 // pred_check
          %p145 = pneg %p36
        $region26: #{tpu_custom_call.1} parent=23 // pred_check_branch
          %147 = sbr.rel (%p145) target = $region28
        $region27: #{tpu_custom_call.1} parent=23 // pred_region
          %s148 = sand.u32 %s26, 1
          %s149 = scalar_lea.sflag [#allocation3], %s148
          %s150 = sand.u32 %s26, 1
          %s151 = smul.addr %s150, 128
          %s152 = scalar_lea.vmem [#allocation2], %s151
          %s153 = smul.u32 32, %s16
          %s155 = ssub.s32 2048, 2048
          %156 = vsyncadd %s149, %s155
          %s157 = smul.addr %s153, 64
          %s158 = scalar_lea.hbm %s0, %s157
          %s159 = sshll.u32 %s152, 4
          %s160 = int_to_ptr.vmem [resolvable:$true] %s159
          %165 = dma.hbm_to_vmem [thread:$0]  %s158, 2048, %s160, %s149, 64, 64, 4
        $region28: #{tpu_custom_call.1} parent=23 // pred_fallthru
          _
      $region24: #{tpu_custom_call.1} parent=5 // pred_fallthru
        _
      %p166 = scmp.le.s32.totalorder 1, %s16
      %p167 = scmp.lt.s32.totalorder %s16, 3
      %p168 = pnand %p166, %p167
      %p169 = pneg %p168
      // Predicated region
      $region29: #{tpu_custom_call.1} parent=5 // pred_check
        _
      $region30: #{tpu_custom_call.1} parent=5 // pred_check_branch
        %171 = sbr.rel (%p168) target = $region32
      $region31: #{tpu_custom_call.1} parent=5 // pred_region
        %s172 = ssub.s32 %s16, 1
        %s173 = sand.u32 %s29, 1
        %s174 = scalar_lea.sflag [#allocation3], %s173
        %s175 = sand.u32 %s29, 1
        %s176 = smul.addr %s175, 128
        %s177 = scalar_lea.vmem [#allocation2], %s176
        // Predicated region
        $region33: #{tpu_custom_call.1} parent=31 // pred_check
          %p178 = pneg %p42
        $region34: #{tpu_custom_call.1} parent=31 // pred_check_branch
          %180 = sbr.rel (%p178) target = $region36
        $region35: #{tpu_custom_call.1} parent=31 // pred_region
          %181 = dma.done %s174, 2048
        $region36: #{tpu_custom_call.1} parent=31 // pred_fallthru
          _
        // Predicated region
        $region37: #{tpu_custom_call.1} parent=31 // pred_check
          %p182 = pneg %p63
        $region38: #{tpu_custom_call.1} parent=31 // pred_check_branch
          %184 = sbr.rel (%p182) target = $region40
        $region39: #{tpu_custom_call.1} parent=31 // pred_region
          %185 = dma.done [#allocation6], 1024
        $region40: #{tpu_custom_call.1} parent=31 // pred_fallthru
          _
        %s186 = sand.u32 %s29, 1
        %s187 = scalar_lea.sflag [#allocation3], %s186
        %s188 = sand.u32 %s29, 1
        %s189 = smul.addr %s188, 128
        %s190 = scalar_lea.vmem [#allocation2], %s189
        %p191 = pneg %p42
        %p192 = pneg %p39
        %p193 = pneg %p63
        %p194 = pneg %p60
        %p195 = pneg %p84
        %p196 = pneg %p81
        %p197 = pneg %p110
        %p198 = pneg %p107
        %s199 = sand.u32 %s97, 1
        %s200 = scalar_lea.sflag [#allocation4], %s199
        %s201 = sand.u32 %s97, 1
        %s202 = smul.addr %s201, 128
        %s203 = scalar_lea.vmem [#allocation7], %s202
        %s204 = smul.u32 32, %s21
        %s205 = smul.u32 32, %s21
        %v207 = vld [vmem:[%s177] sm:$0xf]
        %v208 = vld [vmem:[%s177 + $0x4] sm:$0xf]
        %v209 = vld [vmem:[%s177 + $0x8] sm:$0xf]
        %v210 = vld [vmem:[%s177 + $0xc] sm:$0xf]
        %v211 = vld [vmem:[%s177 + $0x10] sm:$0xf]
        %v212 = vld [vmem:[%s177 + $0x14] sm:$0xf]
        %v213 = vld [vmem:[%s177 + $0x18] sm:$0xf]
        %v214 = vld [vmem:[%s177 + $0x1c] sm:$0xf]
        %v215 = vld [vmem:[%s177 + $0x20] sm:$0xf]
        %v216 = vld [vmem:[%s177 + $0x24] sm:$0xf]
        %v217 = vld [vmem:[%s177 + $0x28] sm:$0xf]
        %v218 = vld [vmem:[%s177 + $0x2c] sm:$0xf]
        %v219 = vld [vmem:[%s177 + $0x30] sm:$0xf]
        %v220 = vld [vmem:[%s177 + $0x34] sm:$0xf]
        %v221 = vld [vmem:[%s177 + $0x38] sm:$0xf]
        %v222 = vld [vmem:[%s177 + $0x3c] sm:$0xf]
        %v223 = vld [vmem:[%s177 + $0x40] sm:$0xf]
        %v224 = vld [vmem:[%s177 + $0x44] sm:$0xf]
        %v225 = vld [vmem:[%s177 + $0x48] sm:$0xf]
        %v226 = vld [vmem:[%s177 + $0x4c] sm:$0xf]
        %v227 = vld [vmem:[%s177 + $0x50] sm:$0xf]
        %v228 = vld [vmem:[%s177 + $0x54] sm:$0xf]
        %v229 = vld [vmem:[%s177 + $0x58] sm:$0xf]
        %v230 = vld [vmem:[%s177 + $0x5c] sm:$0xf]
        %v231 = vld [vmem:[%s177 + $0x60] sm:$0xf]
        %v232 = vld [vmem:[%s177 + $0x64] sm:$0xf]
        %v233 = vld [vmem:[%s177 + $0x68] sm:$0xf]
        %v234 = vld [vmem:[%s177 + $0x6c] sm:$0xf]
        %v235 = vld [vmem:[%s177 + $0x70] sm:$0xf]
        %v236 = vld [vmem:[%s177 + $0x74] sm:$0xf]
        %v237 = vld [vmem:[%s177 + $0x78] sm:$0xf]
        %v238 = vld [vmem:[%s177 + $0x7c] sm:$0xf]
        %v239 = vld [vmem:[#allocation5] sm:$0xf]
        %v240 = vld [vmem:[#allocation5 + $0x4] sm:$0xf]
        %v241 = vld [vmem:[#allocation5 + $0x8] sm:$0xf]
        %v242 = vld [vmem:[#allocation5 + $0xc] sm:$0xf]
        %v243 = vld [vmem:[#allocation5 + $0x10] sm:$0xf]
        %v244 = vld [vmem:[#allocation5 + $0x14] sm:$0xf]
        %v245 = vld [vmem:[#allocation5 + $0x18] sm:$0xf]
        %v246 = vld [vmem:[#allocation5 + $0x1c] sm:$0xf]
        %v247 = vld [vmem:[#allocation5 + $0x20] sm:$0xf]
        %v248 = vld [vmem:[#allocation5 + $0x24] sm:$0xf]
        %v249 = vld [vmem:[#allocation5 + $0x28] sm:$0xf]
        %v250 = vld [vmem:[#allocation5 + $0x2c] sm:$0xf]
        %v251 = vld [vmem:[#allocation5 + $0x30] sm:$0xf]
        %v252 = vld [vmem:[#allocation5 + $0x34] sm:$0xf]
        %v253 = vld [vmem:[#allocation5 + $0x38] sm:$0xf]
        %v254 = vld [vmem:[#allocation5 + $0x3c] sm:$0xf]
        %v255 = vld [vmem:[%s2] sm:$0x1]
        %v257 = vlaneseq
        %v258 = vshrl.u32 %v257, 7
        %v259 = vsub.s32 0, %v258
        %v260 = vrot.slane %v255, %v259
        %v294 = vunpack.c.l.b16 %v207
        %v295 = vunpack.c.l.b16 %v208
        %v296 = vunpack.c.l.b16 %v209
        %v297 = vunpack.c.l.b16 %v210
        %v298 = vunpack.c.l.b16 %v211
        %v299 = vunpack.c.l.b16 %v212
        %v300 = vunpack.c.l.b16 %v213
        %v301 = vunpack.c.l.b16 %v214
        %v302 = vunpack.c.l.b16 %v215
        %v303 = vunpack.c.l.b16 %v216
        %v304 = vunpack.c.l.b16 %v217
        %v305 = vunpack.c.l.b16 %v218
        %v306 = vunpack.c.l.b16 %v219
        %v307 = vunpack.c.l.b16 %v220
        %v308 = vunpack.c.l.b16 %v221
        %v309 = vunpack.c.l.b16 %v222
        %v310 = vunpack.c.l.b16 %v223
        %v311 = vunpack.c.l.b16 %v224
        %v312 = vunpack.c.l.b16 %v225
        %v313 = vunpack.c.l.b16 %v226
        %v314 = vunpack.c.l.b16 %v227
        %v315 = vunpack.c.l.b16 %v228
        %v316 = vunpack.c.l.b16 %v229
        %v317 = vunpack.c.l.b16 %v230
        %v318 = vunpack.c.l.b16 %v231
        %v319 = vunpack.c.l.b16 %v232
        %v320 = vunpack.c.l.b16 %v233
        %v321 = vunpack.c.l.b16 %v234
        %v322 = vunpack.c.l.b16 %v235
        %v323 = vunpack.c.l.b16 %v236
        %v324 = vunpack.c.l.b16 %v237
        %v325 = vunpack.c.l.b16 %v238
        %v326 = vpack.c.b16 %v295, %v294
        %v327 = vpack.c.b16 %v297, %v296
        %v328 = vpack.c.b16 %v299, %v298
        %v329 = vpack.c.b16 %v301, %v300
        %v330 = vpack.c.b16 %v303, %v302
        %v331 = vpack.c.b16 %v305, %v304
        %v332 = vpack.c.b16 %v307, %v306
        %v333 = vpack.c.b16 %v309, %v308
        %v334 = vpack.c.b16 %v311, %v310
        %v335 = vpack.c.b16 %v313, %v312
        %v336 = vpack.c.b16 %v315, %v314
        %v337 = vpack.c.b16 %v317, %v316
        %v338 = vpack.c.b16 %v319, %v318
        %v339 = vpack.c.b16 %v321, %v320
        %v340 = vpack.c.b16 %v323, %v322
        %v341 = vpack.c.b16 %v325, %v324
        %v374 = vunpack.c.l.b16 %v239
        %v375 = vunpack.c.l.b16 %v240
        %v376 = vunpack.c.l.b16 %v241
        %v377 = vunpack.c.l.b16 %v242
        %v378 = vunpack.c.l.b16 %v243
        %v379 = vunpack.c.l.b16 %v244
        %v380 = vunpack.c.l.b16 %v245
        %v381 = vunpack.c.l.b16 %v246
        %v382 = vunpack.c.l.b16 %v247
        %v383 = vunpack.c.l.b16 %v248
        %v384 = vunpack.c.l.b16 %v249
        %v385 = vunpack.c.l.b16 %v250
        %v386 = vunpack.c.l.b16 %v251
        %v387 = vunpack.c.l.b16 %v252
        %v388 = vunpack.c.l.b16 %v253
        %v389 = vunpack.c.l.b16 %v254
        %v390 = vpack.c.b16 %v375, %v374
        %v391 = vpack.c.b16 %v377, %v376
        %v392 = vpack.c.b16 %v379, %v378
        %v393 = vpack.c.b16 %v381, %v380
        %v394 = vpack.c.b16 %v383, %v382
        %v395 = vpack.c.b16 %v385, %v384
        %v396 = vpack.c.b16 %v387, %v386
        %v397 = vpack.c.b16 %v389, %v388
        %406 = vmatprep.subr.bf16.mxu0 0
        %407 = vmatpush1.bf16.msra.mxu0 %v397
        %408 = vmatprep.subr.bf16.mxu0 0
        %409 = vmatpush1.bf16.msra.mxu0 %v396
        %410 = vmatprep.subr.bf16.mxu0 0
        %411 = vmatpush1.bf16.msra.mxu0 %v395
        %412 = vmatprep.subr.bf16.mxu0 0
        %413 = vmatpush1.bf16.msra.mxu0 %v394
        %414 = vmatprep.subr.bf16.mxu0 0
        %415 = vmatpush1.bf16.msra.mxu0 %v393
        %416 = vmatprep.subr.bf16.mxu0 0
        %417 = vmatpush1.bf16.msra.mxu0 %v392
        %418 = vmatprep.subr.bf16.mxu0 0
        %419 = vmatpush1.bf16.msra.mxu0 %v391
        %420 = vmatprep.subr.bf16.mxu0 0
        %421 = vmatpush1.bf16.msra.mxu0 %v390
        %422 = vmatprep.subr.bf16.mxu0 0
        %423 = vmatpush2.bf16.msra.mxu0 0
        %424 = vmatprep.subr.bf16.mxu0 0
        %425 = vmatpush2.bf16.msra.mxu0 0
        %426 = vmatprep.subr.bf16.mxu0 0
        %427 = vmatpush2.bf16.msra.mxu0 0
        %428 = vmatprep.subr.bf16.mxu0 0
        %429 = vmatpush2.bf16.msra.mxu0 0
        %430 = vmatprep.subr.bf16.mxu0 0
        %431 = vmatpush2.bf16.msra.mxu0 0
        %432 = vmatprep.subr.bf16.mxu0 0
        %433 = vmatpush2.bf16.msra.mxu0 0
        %434 = vmatprep.subr.bf16.mxu0 0
        %435 = vmatpush2.bf16.msra.mxu0 0
        %436 = vmatprep.subr.bf16.mxu0 0
        %437 = vmatpush2.bf16.msra.mxu0 0
        %438 = vmatprep.mubr.bf16.mxu0 0
        %439 = vmatmul.mubr.bf16.gmra.mxu0 %v326
        %v440 = vpop.f32.mrf.mxu0
        %v441 = vadd.f32 %v260, %v440
        %v442 = vpop.f32.mrf.mxu0
        %v443 = vpop.f32.mrf.mxu0
        %v444 = vadd.f32 %v260, %v443
        %v445 = vpop.f32.mrf.mxu0
        %446 = vmatprep.mubr.bf16.mxu0 0
        %447 = vmatmul.mubr.bf16.gmra.mxu0 %v327
        %v448 = vpop.f32.mrf.mxu0
        %v449 = vadd.f32 %v260, %v448
        %v450 = vpop.f32.mrf.mxu0
        %v451 = vpop.f32.mrf.mxu0
        %v452 = vadd.f32 %v260, %v451
        %v453 = vpop.f32.mrf.mxu0
        %454 = vmatprep.mubr.bf16.mxu0 0
        %455 = vmatmul.mubr.bf16.gmra.mxu0 %v328
        %v456 = vpop.f32.mrf.mxu0
        %v457 = vadd.f32 %v260, %v456
        %v458 = vpop.f32.mrf.mxu0
        %v459 = vpop.f32.mrf.mxu0
        %v460 = vadd.f32 %v260, %v459
        %v461 = vpop.f32.mrf.mxu0
        %462 = vmatprep.mubr.bf16.mxu0 0
        %463 = vmatmul.mubr.bf16.gmra.mxu0 %v329
        %v464 = vpop.f32.mrf.mxu0
        %v465 = vadd.f32 %v260, %v464
        %v466 = vpop.f32.mrf.mxu0
        %v467 = vpop.f32.mrf.mxu0
        %v468 = vadd.f32 %v260, %v467
        %v469 = vpop.f32.mrf.mxu0
        %470 = vmatprep.mubr.bf16.mxu0 0
        %471 = vmatmul.mubr.bf16.gmra.mxu0 %v330
        %v472 = vpop.f32.mrf.mxu0
        %v473 = vadd.f32 %v260, %v472
        %v474 = vpop.f32.mrf.mxu0
        %v475 = vpop.f32.mrf.mxu0
        %v476 = vadd.f32 %v260, %v475
        %v477 = vpop.f32.mrf.mxu0
        %478 = vmatprep.mubr.bf16.mxu0 0
        %479 = vmatmul.mubr.bf16.gmra.mxu0 %v331
        %v480 = vpop.f32.mrf.mxu0
        %v481 = vadd.f32 %v260, %v480
        %v482 = vpop.f32.mrf.mxu0
        %v483 = vpop.f32.mrf.mxu0
        %v484 = vadd.f32 %v260, %v483
        %v485 = vpop.f32.mrf.mxu0
        %486 = vmatprep.mubr.bf16.mxu0 0
        %487 = vmatmul.mubr.bf16.gmra.mxu0 %v332
        %v488 = vpop.f32.mrf.mxu0
        %v489 = vadd.f32 %v260, %v488
        %v490 = vpop.f32.mrf.mxu0
        %v491 = vpop.f32.mrf.mxu0
        %v492 = vadd.f32 %v260, %v491
        %v493 = vpop.f32.mrf.mxu0
        %494 = vmatprep.mubr.bf16.mxu0 0
        %495 = vmatmul.mubr.bf16.gmra.mxu0 %v333
        %v496 = vpop.f32.mrf.mxu0
        %v497 = vadd.f32 %v260, %v496
        %v498 = vpop.f32.mrf.mxu0
        %v499 = vpop.f32.mrf.mxu0
        %v500 = vadd.f32 %v260, %v499
        %v501 = vpop.f32.mrf.mxu0
        %502 = vmatprep.mubr.bf16.mxu0 0
        %503 = vmatmul.mubr.bf16.gmra.mxu0 %v334
        %v504 = vpop.f32.mrf.mxu0
        %v505 = vadd.f32 %v260, %v504
        %v506 = vpop.f32.mrf.mxu0
        %v507 = vpop.f32.mrf.mxu0
        %v508 = vadd.f32 %v260, %v507
        %v509 = vpop.f32.mrf.mxu0
        %510 = vmatprep.mubr.bf16.mxu0 0
        %511 = vmatmul.mubr.bf16.gmra.mxu0 %v335
        %v512 = vpop.f32.mrf.mxu0
        %v513 = vadd.f32 %v260, %v512
        %v514 = vpop.f32.mrf.mxu0
        %v515 = vpop.f32.mrf.mxu0
        %v516 = vadd.f32 %v260, %v515
        %v517 = vpop.f32.mrf.mxu0
        %518 = vmatprep.mubr.bf16.mxu0 0
        %519 = vmatmul.mubr.bf16.gmra.mxu0 %v336
        %v520 = vpop.f32.mrf.mxu0
        %v521 = vadd.f32 %v260, %v520
        %v522 = vpop.f32.mrf.mxu0
        %v523 = vpop.f32.mrf.mxu0
        %v524 = vadd.f32 %v260, %v523
        %v525 = vpop.f32.mrf.mxu0
        %526 = vmatprep.mubr.bf16.mxu0 0
        %527 = vmatmul.mubr.bf16.gmra.mxu0 %v337
        %v528 = vpop.f32.mrf.mxu0
        %v529 = vadd.f32 %v260, %v528
        %v530 = vpop.f32.mrf.mxu0
        %v531 = vpop.f32.mrf.mxu0
        %v532 = vadd.f32 %v260, %v531
        %v533 = vpop.f32.mrf.mxu0
        %534 = vmatprep.mubr.bf16.mxu0 0
        %535 = vmatmul.mubr.bf16.gmra.mxu0 %v338
        %v536 = vpop.f32.mrf.mxu0
        %v537 = vadd.f32 %v260, %v536
        %v538 = vpop.f32.mrf.mxu0
        %v539 = vpop.f32.mrf.mxu0
        %v540 = vadd.f32 %v260, %v539
        %v541 = vpop.f32.mrf.mxu0
        %542 = vmatprep.mubr.bf16.mxu0 0
        %543 = vmatmul.mubr.bf16.gmra.mxu0 %v339
        %v544 = vpop.f32.mrf.mxu0
        %v545 = vadd.f32 %v260, %v544
        %v546 = vpop.f32.mrf.mxu0
        %v547 = vpop.f32.mrf.mxu0
        %v548 = vadd.f32 %v260, %v547
        %v549 = vpop.f32.mrf.mxu0
        %550 = vmatprep.mubr.bf16.mxu0 0
        %551 = vmatmul.mubr.bf16.gmra.mxu0 %v340
        %v552 = vpop.f32.mrf.mxu0
        %v553 = vadd.f32 %v260, %v552
        %v554 = vpop.f32.mrf.mxu0
        %v555 = vpop.f32.mrf.mxu0
        %v556 = vadd.f32 %v260, %v555
        %v557 = vpop.f32.mrf.mxu0
        %558 = vmatprep.mubr.bf16.mxu0 0
        %559 = vmatmul.mubr.bf16.gmra.mxu0 %v341
        %v560 = vpop.f32.mrf.mxu0
        %v561 = vadd.f32 %v260, %v560
        %v562 = vpop.f32.mrf.mxu0
        %v563 = vpop.f32.mrf.mxu0
        %v564 = vadd.f32 %v260, %v563
        %v565 = vpop.f32.mrf.mxu0
        %566 = vdwg.mxu0
        %v567 = vmax.f32 %v441, 0.0
        %v568 = vmax.f32 %v444, 0.0
        %v569 = vmax.f32 %v449, 0.0
        %v570 = vmax.f32 %v452, 0.0
        %v571 = vmax.f32 %v457, 0.0
        %v572 = vmax.f32 %v460, 0.0
        %v573 = vmax.f32 %v465, 0.0
        %v574 = vmax.f32 %v468, 0.0
        %v575 = vmax.f32 %v473, 0.0
        %v576 = vmax.f32 %v476, 0.0
        %v577 = vmax.f32 %v481, 0.0
        %v578 = vmax.f32 %v484, 0.0
        %v579 = vmax.f32 %v489, 0.0
        %v580 = vmax.f32 %v492, 0.0
        %v581 = vmax.f32 %v497, 0.0
        %v582 = vmax.f32 %v500, 0.0
        %v583 = vmax.f32 %v505, 0.0
        %v584 = vmax.f32 %v508, 0.0
        %v585 = vmax.f32 %v513, 0.0
        %v586 = vmax.f32 %v516, 0.0
        %v587 = vmax.f32 %v521, 0.0
        %v588 = vmax.f32 %v524, 0.0
        %v589 = vmax.f32 %v529, 0.0
        %v590 = vmax.f32 %v532, 0.0
        %v591 = vmax.f32 %v537, 0.0
        %v592 = vmax.f32 %v540, 0.0
        %v593 = vmax.f32 %v545, 0.0
        %v594 = vmax.f32 %v548, 0.0
        %v595 = vmax.f32 %v553, 0.0
        %v596 = vmax.f32 %v556, 0.0
        %v597 = vmax.f32 %v561, 0.0
        %v598 = vmax.f32 %v564, 0.0
        %v599 = vunpack.c.l.bf16 %v207
        %v600 = vunpack.c.l.bf16 %v208
        %v601 = vunpack.c.l.bf16 %v209
        %v602 = vunpack.c.l.bf16 %v210
        %v603 = vunpack.c.l.bf16 %v211
        %v604 = vunpack.c.l.bf16 %v212
        %v605 = vunpack.c.l.bf16 %v213
        %v606 = vunpack.c.l.bf16 %v214
        %v607 = vunpack.c.l.bf16 %v215
        %v608 = vunpack.c.l.bf16 %v216
        %v609 = vunpack.c.l.bf16 %v217
        %v610 = vunpack.c.l.bf16 %v218
        %v611 = vunpack.c.l.bf16 %v219
        %v612 = vunpack.c.l.bf16 %v220
        %v613 = vunpack.c.l.bf16 %v221
        %v614 = vunpack.c.l.bf16 %v222
        %v615 = vunpack.c.l.bf16 %v223
        %v616 = vunpack.c.l.bf16 %v224
        %v617 = vunpack.c.l.bf16 %v225
        %v618 = vunpack.c.l.bf16 %v226
        %v619 = vunpack.c.l.bf16 %v227
        %v620 = vunpack.c.l.bf16 %v228
        %v621 = vunpack.c.l.bf16 %v229
        %v622 = vunpack.c.l.bf16 %v230
        %v623 = vunpack.c.l.bf16 %v231
        %v624 = vunpack.c.l.bf16 %v232
        %v625 = vunpack.c.l.bf16 %v233
        %v626 = vunpack.c.l.bf16 %v234
        %v627 = vunpack.c.l.bf16 %v235
        %v628 = vunpack.c.l.bf16 %v236
        %v629 = vunpack.c.l.bf16 %v237
        %v630 = vunpack.c.l.bf16 %v238
        %v631 = vadd.f32 %v567, %v599
        %v632 = vadd.f32 %v568, %v600
        %v633 = vadd.f32 %v569, %v601
        %v634 = vadd.f32 %v570, %v602
        %v635 = vadd.f32 %v571, %v603
        %v636 = vadd.f32 %v572, %v604
        %v637 = vadd.f32 %v573, %v605
        %v638 = vadd.f32 %v574, %v606
        %v639 = vadd.f32 %v575, %v607
        %v640 = vadd.f32 %v576, %v608
        %v641 = vadd.f32 %v577, %v609
        %v642 = vadd.f32 %v578, %v610
        %v643 = vadd.f32 %v579, %v611
        %v644 = vadd.f32 %v580, %v612
        %v645 = vadd.f32 %v581, %v613
        %v646 = vadd.f32 %v582, %v614
        %v647 = vadd.f32 %v583, %v615
        %v648 = vadd.f32 %v584, %v616
        %v649 = vadd.f32 %v585, %v617
        %v650 = vadd.f32 %v586, %v618
        %v651 = vadd.f32 %v587, %v619
        %v652 = vadd.f32 %v588, %v620
        %v653 = vadd.f32 %v589, %v621
        %v654 = vadd.f32 %v590, %v622
        %v655 = vadd.f32 %v591, %v623
        %v656 = vadd.f32 %v592, %v624
        %v657 = vadd.f32 %v593, %v625
        %v658 = vadd.f32 %v594, %v626
        %v659 = vadd.f32 %v595, %v627
        %v660 = vadd.f32 %v596, %v628
        %v661 = vadd.f32 %v597, %v629
        %v662 = vadd.f32 %v598, %v630
        %v663 = vmax.f32 %v631, 0.0
        %v664 = vmax.f32 %v632, 0.0
        %v665 = vmax.f32 %v633, 0.0
        %v666 = vmax.f32 %v634, 0.0
        %v667 = vmax.f32 %v635, 0.0
        %v668 = vmax.f32 %v636, 0.0
        %v669 = vmax.f32 %v637, 0.0
        %v670 = vmax.f32 %v638, 0.0
        %v671 = vmax.f32 %v639, 0.0
        %v672 = vmax.f32 %v640, 0.0
        %v673 = vmax.f32 %v641, 0.0
        %v674 = vmax.f32 %v642, 0.0
        %v675 = vmax.f32 %v643, 0.0
        %v676 = vmax.f32 %v644, 0.0
        %v677 = vmax.f32 %v645, 0.0
        %v678 = vmax.f32 %v646, 0.0
        %v679 = vmax.f32 %v647, 0.0
        %v680 = vmax.f32 %v648, 0.0
        %v681 = vmax.f32 %v649, 0.0
        %v682 = vmax.f32 %v650, 0.0
        %v683 = vmax.f32 %v651, 0.0
        %v684 = vmax.f32 %v652, 0.0
        %v685 = vmax.f32 %v653, 0.0
        %v686 = vmax.f32 %v654, 0.0
        %v687 = vmax.f32 %v655, 0.0
        %v688 = vmax.f32 %v656, 0.0
        %v689 = vmax.f32 %v657, 0.0
        %v690 = vmax.f32 %v658, 0.0
        %v691 = vmax.f32 %v659, 0.0
        %v692 = vmax.f32 %v660, 0.0
        %v693 = vmax.f32 %v661, 0.0
        %v694 = vmax.f32 %v662, 0.0
        %v695 = vpack.c.bf16 %v664, %v663
        %v696 = vpack.c.bf16 %v666, %v665
        %v697 = vpack.c.bf16 %v668, %v667
        %v698 = vpack.c.bf16 %v670, %v669
        %v699 = vpack.c.bf16 %v672, %v671
        %v700 = vpack.c.bf16 %v674, %v673
        %v701 = vpack.c.bf16 %v676, %v675
        %v702 = vpack.c.bf16 %v678, %v677
        %v703 = vpack.c.bf16 %v680, %v679
        %v704 = vpack.c.bf16 %v682, %v681
        %v705 = vpack.c.bf16 %v684, %v683
        %v706 = vpack.c.bf16 %v686, %v685
        %v707 = vpack.c.bf16 %v688, %v687
        %v708 = vpack.c.bf16 %v690, %v689
        %v709 = vpack.c.bf16 %v692, %v691
        %v710 = vpack.c.bf16 %v694, %v693
        %v727 = vunpack.c.l.b16 %v695
        %v728 = vunpack.c.h.b16 %v695
        %v729 = vunpack.c.l.b16 %v696
        %v730 = vunpack.c.h.b16 %v696
        %v731 = vunpack.c.l.b16 %v697
        %v732 = vunpack.c.h.b16 %v697
        %v733 = vunpack.c.l.b16 %v698
        %v734 = vunpack.c.h.b16 %v698
        %v735 = vunpack.c.l.b16 %v699
        %v736 = vunpack.c.h.b16 %v699
        %v737 = vunpack.c.l.b16 %v700
        %v738 = vunpack.c.h.b16 %v700
        %v739 = vunpack.c.l.b16 %v701
        %v740 = vunpack.c.h.b16 %v701
        %v741 = vunpack.c.l.b16 %v702
        %v742 = vunpack.c.h.b16 %v702
        %v743 = vunpack.c.l.b16 %v703
        %v744 = vunpack.c.h.b16 %v703
        %v745 = vunpack.c.l.b16 %v704
        %v746 = vunpack.c.h.b16 %v704
        %v747 = vunpack.c.l.b16 %v705
        %v748 = vunpack.c.h.b16 %v705
        %v749 = vunpack.c.l.b16 %v706
        %v750 = vunpack.c.h.b16 %v706
        %v751 = vunpack.c.l.b16 %v707
        %v752 = vunpack.c.h.b16 %v707
        %v753 = vunpack.c.l.b16 %v708
        %v754 = vunpack.c.h.b16 %v708
        %v755 = vunpack.c.l.b16 %v709
        %v756 = vunpack.c.h.b16 %v709
        %v757 = vunpack.c.l.b16 %v710
        %v758 = vunpack.c.h.b16 %v710
        %v759 = vpack.c.b16 %v727, %v727
        %v760 = vpack.c.b16 %v728, %v728
        %v761 = vpack.c.b16 %v729, %v729
        %v762 = vpack.c.b16 %v730, %v730
        %v763 = vpack.c.b16 %v731, %v731
        %v764 = vpack.c.b16 %v732, %v732
        %v765 = vpack.c.b16 %v733, %v733
        %v766 = vpack.c.b16 %v734, %v734
        %v767 = vpack.c.b16 %v735, %v735
        %v768 = vpack.c.b16 %v736, %v736
        %v769 = vpack.c.b16 %v737, %v737
        %v770 = vpack.c.b16 %v738, %v738
        %v771 = vpack.c.b16 %v739, %v739
        %v772 = vpack.c.b16 %v740, %v740
        %v773 = vpack.c.b16 %v741, %v741
        %v774 = vpack.c.b16 %v742, %v742
        %v775 = vpack.c.b16 %v743, %v743
        %v776 = vpack.c.b16 %v744, %v744
        %v777 = vpack.c.b16 %v745, %v745
        %v778 = vpack.c.b16 %v746, %v746
        %v779 = vpack.c.b16 %v747, %v747
        %v780 = vpack.c.b16 %v748, %v748
        %v781 = vpack.c.b16 %v749, %v749
        %v782 = vpack.c.b16 %v750, %v750
        %v783 = vpack.c.b16 %v751, %v751
        %v784 = vpack.c.b16 %v752, %v752
        %v785 = vpack.c.b16 %v753, %v753
        %v786 = vpack.c.b16 %v754, %v754
        %v787 = vpack.c.b16 %v755, %v755
        %v788 = vpack.c.b16 %v756, %v756
        %v789 = vpack.c.b16 %v757, %v757
        %v790 = vpack.c.b16 %v758, %v758
        %823 = vst [vmem:[%s203] sm:$0xf] %v759
        %824 = vst [vmem:[%s203 + $0x4] sm:$0xf] %v760
        %825 = vst [vmem:[%s203 + $0x8] sm:$0xf] %v761
        %826 = vst [vmem:[%s203 + $0xc] sm:$0xf] %v762
        %827 = vst [vmem:[%s203 + $0x10] sm:$0xf] %v763
        %828 = vst [vmem:[%s203 + $0x14] sm:$0xf] %v764
        %829 = vst [vmem:[%s203 + $0x18] sm:$0xf] %v765
        %830 = vst [vmem:[%s203 + $0x1c] sm:$0xf] %v766
        %831 = vst [vmem:[%s203 + $0x20] sm:$0xf] %v767
        %832 = vst [vmem:[%s203 + $0x24] sm:$0xf] %v768
        %833 = vst [vmem:[%s203 + $0x28] sm:$0xf] %v769
        %834 = vst [vmem:[%s203 + $0x2c] sm:$0xf] %v770
        %835 = vst [vmem:[%s203 + $0x30] sm:$0xf] %v771
        %836 = vst [vmem:[%s203 + $0x34] sm:$0xf] %v772
        %837 = vst [vmem:[%s203 + $0x38] sm:$0xf] %v773
        %838 = vst [vmem:[%s203 + $0x3c] sm:$0xf] %v774
        %839 = vst [vmem:[%s203 + $0x40] sm:$0xf] %v775
        %840 = vst [vmem:[%s203 + $0x44] sm:$0xf] %v776
        %841 = vst [vmem:[%s203 + $0x48] sm:$0xf] %v777
        %842 = vst [vmem:[%s203 + $0x4c] sm:$0xf] %v778
        %843 = vst [vmem:[%s203 + $0x50] sm:$0xf] %v779
        %844 = vst [vmem:[%s203 + $0x54] sm:$0xf] %v780
        %845 = vst [vmem:[%s203 + $0x58] sm:$0xf] %v781
        %846 = vst [vmem:[%s203 + $0x5c] sm:$0xf] %v782
        %847 = vst [vmem:[%s203 + $0x60] sm:$0xf] %v783
        %848 = vst [vmem:[%s203 + $0x64] sm:$0xf] %v784
        %849 = vst [vmem:[%s203 + $0x68] sm:$0xf] %v785
        %850 = vst [vmem:[%s203 + $0x6c] sm:$0xf] %v786
        %851 = vst [vmem:[%s203 + $0x70] sm:$0xf] %v787
        %852 = vst [vmem:[%s203 + $0x74] sm:$0xf] %v788
        %853 = vst [vmem:[%s203 + $0x78] sm:$0xf] %v789
        %854 = vst [vmem:[%s203 + $0x7c] sm:$0xf] %v790
        %s855 = sand.u32 %s97, 1
        %s856 = scalar_lea.sflag [#allocation4], %s855
        %s857 = sand.u32 %s97, 1
        %s858 = smul.addr %s857, 128
        %s859 = scalar_lea.vmem [#allocation7], %s858
        // Predicated region
        $region41: #{tpu_custom_call.1} parent=31 // pred_check
          %p860 = pneg %p107
        $region42: #{tpu_custom_call.1} parent=31 // pred_check_branch
          %862 = sbr.rel (%p860) target = $region44
        $region43: #{tpu_custom_call.1} parent=31 // pred_region
          %s863 = smul.u32 32, %s21
          %s865 = ssub.s32 2048, 2048
          %866 = vsyncadd %s856, %s865
          %s867 = smul.addr %s863, 64
          %s868 = scalar_lea.hbm %s3, %s867
          %s869 = sshll.u32 %s859, 4
          %s870 = int_to_ptr.vmem [resolvable:$true] %s869
          %875 = dma.vmem_to_hbm [thread:$0]  %s870, 2048, %s868, %s856, 64, 64, 4
        $region44: #{tpu_custom_call.1} parent=31 // pred_fallthru
          _
      $region32: #{tpu_custom_call.1} parent=5 // pred_fallthru
        _
      %p876 = scmp.le.s32.totalorder 2, %s16
      // Predicated region
      $region45: #{tpu_custom_call.1} parent=5 // pred_check
        %p877 = pneg %p876
      $region46: #{tpu_custom_call.1} parent=5 // pred_check_branch
        %879 = sbr.rel (%p877) target = $region48
      $region47: #{tpu_custom_call.1} parent=5 // pred_region
        %s880 = ssub.s32 %s16, 2
        // Predicated region
        $region49: #{tpu_custom_call.1} parent=47 // pred_check
          %p881 = pneg %p113
        $region50: #{tpu_custom_call.1} parent=47 // pred_check_branch
          %883 = sbr.rel (%p881) target = $region52
        $region51: #{tpu_custom_call.1} parent=47 // pred_region
          %s884 = sand.u32 %s98, 1
          %s885 = scalar_lea.sflag [#allocation4], %s884
          %s886 = sand.u32 %s98, 1
          %s887 = smul.addr %s886, 128
          %s888 = scalar_lea.vmem [#allocation7], %s887
          %889 = dma.done %s885, 2048
        $region52: #{tpu_custom_call.1} parent=47 // pred_fallthru
          _
      $region48: #{tpu_custom_call.1} parent=5 // pred_fallthru
        _
    $region6: #{tpu_custom_call.1} parent=1 // loop_footer
      %s20 = sadd.s32 1, %s16
    $region7: #{tpu_custom_call.1} parent=1 // loop_footer_branch
      %15 = sbr.rel target = $region3
    $region8: #{tpu_custom_call.1} parent=1 // loop_exit
      _
    %890 = vsyncpa [#allocation3], 1
    %s891 = scalar_lea.sflag [#allocation3], 1
    %892 = vsyncpa %s891, 1
    %893 = vsyncpa [#allocation6], 1
    %894 = vsyncpa [#allocation4], 1
    %s895 = scalar_lea.sflag [#allocation4], 1
    %896 = vsyncpa %s895, 1

// kernel: tpu_custom_call.1
$region0: #{tpu_custom_call.1}
  #allocation0 [shape = 'u32[]', space=smem, size = 0x4, offset = 0x4, fixed_abs, tag = 'smem constant byte address 0x4 - core index']
  #allocation1 [shape = 'u32[144,128]{1,0:T(1,128)}', space=vmem, size = 0x12000, scoped, tag = 'internal scratch']
  %s0 = inlined_call_operand.hbm [shape: bf16[512,128], index: 0, kind: input, shape index: {}]
  %s1 = inlined_call_operand.hbm [shape: bf16[128,128], index: 1, kind: input, shape index: {}]
  %s2 = inlined_call_operand.vmem [shape: f32[1,128], index: 2, kind: input, shape index: {}]
  %s3 = inlined_call_operand.hbm [shape: bf16[512,128], index: 3, kind: output, shape index: {}]
  %s4 = sld [smem:[#allocation0]]
  $region53: #{tpu_custom_call.1} parent=0
    _
  %s6 = ssub.s32 1, %s4
  %s7 = scalar_select 0, %s6, %s4
  $region1: #{tpu_custom_call.1} parent=0
    #allocation2 [shape = 'u8[131072]{0}', space=vmem, size = 0x20000, scoped, tag = 'input window, operand 0']
    #allocation3 [shape = 's32[2]{0}', space=sflag, size = 0x8, scoped, tag = 'scoped memory for tpu_custom_call.1']
    #allocation4 [shape = 's32[2]{0}', space=sflag, size = 0x8, scoped, tag = 'scoped memory for tpu_custom_call.1']
    #allocation5 [shape = 'u8[32768]{0}', space=vmem, size = 0x8000, scoped, tag = 'input window, operand 1, single buffered']
    #allocation6 [shape = 's32[1]{0}', space=sflag, size = 0x4, scoped, tag = 'scoped memory for tpu_custom_call.1']
    #allocation7 [shape = 'u8[131072]{0}', space=vmem, size = 0x20000, scoped, tag = 'output window, operand 0']
    %8 = vsyncpa [#allocation3], 0
    %s9 = scalar_lea.sflag [#allocation3], 1
    %10 = vsyncpa %s9, 0
    %11 = vsyncpa [#allocation6], 0
    %12 = vsyncpa [#allocation4], 0
    %s13 = scalar_lea.sflag [#allocation4], 1
    %14 = vsyncpa %s13, 0
    loop: start=0, step=1, limit=4
    $region2: #{tpu_custom_call.1} parent=1 // loop_pre_header
      _
    $region3: #{tpu_custom_call.1} parent=1 // loop_header
      %s16 = sphi 0, %s20
      %p17 = scmp.ge.s32.totalorder %s16, 4
      %s26 = sphi 0, %s28
      %s29 = sphi 0, %s26
      %s30 = sphi 0, %s29
      %s46 = sphi 0, %s30
      %s50 = sphi 0, %s50
      %s52 = sphi 0, %s50
      %s53 = sphi 0, %s52
      %s67 = sphi 0, %s53
      %s71 = sphi 0, %s71
      %s73 = sphi 0, %s71
      %s74 = sphi 0, %s73
      %s88 = sphi 0, %s74
      %s94 = sphi 0, %s96
      %s97 = sphi 0, %s94
      %s98 = sphi 0, %s97
      %s114 = sphi 0, %s98
    $region4: #{tpu_custom_call.1} parent=1 // loop_header_branch
      %19 = sbr.rel (%p17) target = $region8
    $region5: #{tpu_custom_call.1} parent=1 // loop_body
      %s21 = ssub.s32 %s16, 1
      %s22 = ssub.s32 %s16, 2
      %s23 = sadd.s32 %s16, 1
      %s24 = ssub.s32 %s16, %s23
      %p25 = scmp.eq.s32.totalorder %s24, 0
      %s27 = sadd.s32 %s26, 1
      %s28 = scalar_select %p25, %s26, %s27
      %p31 = pneg %p25
      %p32 = scmp.eq.s32.totalorder %s16, 1
      %p33 = por %p31, %p32
      %p34 = scmp.ne.s32.totalorder %s26, %s29
      %p35 = scmp.eq.s32.totalorder %s16, 0
      %p36 = por %p34, %p35
      %p37 = scmp.ne.s32.totalorder %s26, %s29
      %p38 = scmp.eq.s32.totalorder %s21, 1
      %p39 = por %p37, %p38
      %p40 = scmp.ne.s32.totalorder %s29, %s30
      %p41 = scmp.eq.s32.totalorder %s21, 0
      %p42 = por %p40, %p41
      %p43 = scmp.ne.s32.totalorder %s29, %s30
      %p44 = scmp.eq.s32.totalorder %s22, 1
      %p45 = por %p43, %p44
      %p47 = scmp.ne.s32.totalorder %s30, %s46
      %p48 = scmp.eq.s32.totalorder %s22, 0
      %p49 = por %p47, %p48
      %s51 = sadd.s32 %s50, 1
      %p54 = scmp.eq.s32.totalorder %s16, 1
      %p55 = scmp.ne.s32.totalorder %s50, %s52
      %p56 = scmp.eq.s32.totalorder %s16, 0
      %p57 = por %p55, %p56
      %p58 = scmp.ne.s32.totalorder %s50, %s52
      %p59 = scmp.eq.s32.totalorder %s21, 1
      %p60 = por %p58, %p59
      %p61 = scmp.ne.s32.totalorder %s52, %s53
      %p62 = scmp.eq.s32.totalorder %s21, 0
      %p63 = por %p61, %p62
      %p64 = scmp.ne.s32.totalorder %s52, %s53
      %p65 = scmp.eq.s32.totalorder %s22, 1
      %p66 = por %p64, %p65
      %p68 = scmp.ne.s32.totalorder %s53, %s67
      %p69 = scmp.eq.s32.totalorder %s22, 0
      %p70 = por %p68, %p69
      %s72 = sadd.s32 %s71, 1
      %p75 = scmp.eq.s32.totalorder %s16, 1
      %p76 = scmp.ne.s32.totalorder %s71, %s73
      %p77 = scmp.eq.s32.totalorder %s16, 0
      %p78 = por %p76, %p77
      %p79 = scmp.ne.s32.totalorder %s71, %s73
      %p80 = scmp.eq.s32.totalorder %s21, 1
      %p81 = por %p79, %p80
      %p82 = scmp.ne.s32.totalorder %s73, %s74
      %p83 = scmp.eq.s32.totalorder %s21, 0
      %p84 = por %p82, %p83
      %p85 = scmp.ne.s32.totalorder %s73, %s74
      %p86 = scmp.eq.s32.totalorder %s22, 1
      %p87 = por %p85, %p86
      %p89 = scmp.ne.s32.totalorder %s74, %s88
      %p90 = scmp.eq.s32.totalorder %s22, 0
      %p91 = por %p89, %p90
      %s92 = ssub.s32 %s16, %s23
      %p93 = scmp.eq.s32.totalorder %s92, 0
      %s95 = sadd.s32 %s94, 1
      %s96 = scalar_select %p93, %s94, %s95
      %p99 = pneg %p93
      %p100 = scmp.eq.s32.totalorder %s16, 1
      %p101 = por %p99, %p100
      %p102 = scmp.ne.s32.totalorder %s94, %s97
      %p103 = scmp.eq.s32.totalorder %s16, 0
      %p104 = por %p102, %p103
      %p105 = scmp.ne.s32.totalorder %s94, %s97
      %p106 = scmp.eq.s32.totalorder %s21, 1
      %p107 = por %p105, %p106
      %p108 = scmp.ne.s32.totalorder %s97, %s98
      %p109 = scmp.eq.s32.totalorder %s21, 0
      %p110 = por %p108, %p109
      %p111 = scmp.ne.s32.totalorder %s97, %s98
      %p112 = scmp.eq.s32.totalorder %s22, 1
      %p113 = por %p111, %p112
      %p115 = scmp.ne.s32.totalorder %s98, %s114
      %p116 = scmp.eq.s32.totalorder %s22, 0
      %p117 = por %p115, %p116
      %p118 = scmp.le.s32.totalorder 1, %s16
      %p119 = scmp.lt.s32.totalorder %s16, 3
      %p120 = pnand %p118, %p119
      %p121 = pneg %p120
      // Predicated region
      $region9: #{tpu_custom_call.1} parent=5 // pred_check
        _
      $region10: #{tpu_custom_call.1} parent=5 // pred_check_branch
        %123 = sbr.rel (%p120) target = $region12
      $region11: #{tpu_custom_call.1} parent=5 // pred_region
        %s124 = ssub.s32 %s16, 1
        // Predicated region
        $region13: #{tpu_custom_call.1} parent=11 // pred_check
          %p125 = pneg %p63
        $region14: #{tpu_custom_call.1} parent=11 // pred_check_branch
          %127 = sbr.rel (%p125) target = $region16
        $region15: #{tpu_custom_call.1} parent=11 // pred_region
          %s129 = ssub.s32 1024, 1024
          %130 = vsyncadd [#allocation6], %s129
          %s131 = sshll.u32 [#allocation5], 4
          %s132 = int_to_ptr.vmem [resolvable:$true] %s131
          %137 = dma.hbm_to_vmem [thread:$0]  %s1, 1024, %s132, [#allocation6], 64, 64, 4
        $region16: #{tpu_custom_call.1} parent=11 // pred_fallthru
          _
        // Predicated region
        $region17: #{tpu_custom_call.1} parent=11 // pred_check
          %p138 = pneg %p84
        $region18: #{tpu_custom_call.1} parent=11 // pred_check_branch
          %140 = sbr.rel (%p138) target = $region20
        $region19: #{tpu_custom_call.1} parent=11 // pred_region
          _
        $region20: #{tpu_custom_call.1} parent=11 // pred_fallthru
          _
      $region12: #{tpu_custom_call.1} parent=5 // pred_fallthru
        _
      %p141 = scmp.lt.s32.totalorder %s16, 2
      // Predicated region
      $region21: #{tpu_custom_call.1} parent=5 // pred_check
        %p142 = pneg %p141
      $region22: #{tpu_custom_call.1} parent=5 // pred_check_branch
        %144 = sbr.rel (%p142) target = $region24
      $region23: #{tpu_custom_call.1} parent=5 // pred_region
        // Predicated region
        $region25: #{tpu_custom_call.1} parent=23 // pred_check
          %p145 = pneg %p36
        $region26: #{tpu_custom_call.1} parent=23 // pred_check_branch
          %147 = sbr.rel (%p145) target = $region28
        $region27: #{tpu_custom_call.1} parent=23 // pred_region
          %s148 = sand.u32 %s26, 1
          %s149 = scalar_lea.sflag [#allocation3], %s148
          %s150 = sand.u32 %s26, 1
          %s151 = smul.addr %s150, 128
          %s152 = scalar_lea.vmem [#allocation2], %s151
          %s153 = smul.u32 32, %s16
          %s155 = ssub.s32 2048, 2048
          %156 = vsyncadd %s149, %s155
          %s157 = smul.addr %s153, 64
          %s158 = scalar_lea.hbm %s0, %s157
          %s159 = sshll.u32 %s152, 4
          %s160 = int_to_ptr.vmem [resolvable:$true] %s159
          %165 = dma.hbm_to_vmem [thread:$0]  %s158, 2048, %s160, %s149, 64, 64, 4
        $region28: #{tpu_custom_call.1} parent=23 // pred_fallthru
          _
      $region24: #{tpu_custom_call.1} parent=5 // pred_fallthru
        _
      %p166 = scmp.le.s32.totalorder 1, %s16
      %p167 = scmp.lt.s32.totalorder %s16, 3
      %p168 = pnand %p166, %p167
      %p169 = pneg %p168
      // Predicated region
      $region29: #{tpu_custom_call.1} parent=5 // pred_check
        _
      $region30: #{tpu_custom_call.1} parent=5 // pred_check_branch
        %171 = sbr.rel (%p168) target = $region32
      $region31: #{tpu_custom_call.1} parent=5 // pred_region
        %s172 = ssub.s32 %s16, 1
        %s173 = sand.u32 %s29, 1
        %s174 = scalar_lea.sflag [#allocation3], %s173
        %s175 = sand.u32 %s29, 1
        %s176 = smul.addr %s175, 128
        %s177 = scalar_lea.vmem [#allocation2], %s176
        // Predicated region
        $region33: #{tpu_custom_call.1} parent=31 // pred_check
          %p178 = pneg %p42
        $region34: #{tpu_custom_call.1} parent=31 // pred_check_branch
          %180 = sbr.rel (%p178) target = $region36
        $region35: #{tpu_custom_call.1} parent=31 // pred_region
          %181 = dma.done %s174, 2048
        $region36: #{tpu_custom_call.1} parent=31 // pred_fallthru
          _
        // Predicated region
        $region37: #{tpu_custom_call.1} parent=31 // pred_check
          %p182 = pneg %p63
        $region38: #{tpu_custom_call.1} parent=31 // pred_check_branch
          %184 = sbr.rel (%p182) target = $region40
        $region39: #{tpu_custom_call.1} parent=31 // pred_region
          %185 = dma.done [#allocation6], 1024
        $region40: #{tpu_custom_call.1} parent=31 // pred_fallthru
          _
        %s186 = sand.u32 %s29, 1
        %s187 = scalar_lea.sflag [#allocation3], %s186
        %s188 = sand.u32 %s29, 1
        %s189 = smul.addr %s188, 128
        %s190 = scalar_lea.vmem [#allocation2], %s189
        %p191 = pneg %p42
        %p192 = pneg %p39
        %p193 = pneg %p63
        %p194 = pneg %p60
        %p195 = pneg %p84
        %p196 = pneg %p81
        %p197 = pneg %p110
        %p198 = pneg %p107
        %s199 = sand.u32 %s97, 1
        %s200 = scalar_lea.sflag [#allocation4], %s199
        %s201 = sand.u32 %s97, 1
        %s202 = smul.addr %s201, 128
        %s203 = scalar_lea.vmem [#allocation7], %s202
        %s204 = smul.u32 32, %s21
        %s205 = smul.u32 32, %s21
        %v207 = vld [vmem:[%s177] sm:$0xf]
        %v208 = vld [vmem:[%s177 + $0x4] sm:$0xf]
        %v209 = vld [vmem:[%s177 + $0x8] sm:$0xf]
        %v210 = vld [vmem:[%s177 + $0xc] sm:$0xf]
        %v211 = vld [vmem:[%s177 + $0x10] sm:$0xf]
        %v212 = vld [vmem:[%s177 + $0x14] sm:$0xf]
        %v213 = vld [vmem:[%s177 + $0x18] sm:$0xf]
        %v214 = vld [vmem:[%s177 + $0x1c] sm:$0xf]
        %v215 = vld [vmem:[%s177 + $0x20] sm:$0xf]
        %v216 = vld [vmem:[%s177 + $0x24] sm:$0xf]
        %v217 = vld [vmem:[%s177 + $0x28] sm:$0xf]
        %v218 = vld [vmem:[%s177 + $0x2c] sm:$0xf]
        %v219 = vld [vmem:[%s177 + $0x30] sm:$0xf]
        %v220 = vld [vmem:[%s177 + $0x34] sm:$0xf]
        %v221 = vld [vmem:[%s177 + $0x38] sm:$0xf]
        %v222 = vld [vmem:[%s177 + $0x3c] sm:$0xf]
        %v223 = vld [vmem:[%s177 + $0x40] sm:$0xf]
        %v224 = vld [vmem:[%s177 + $0x44] sm:$0xf]
        %v225 = vld [vmem:[%s177 + $0x48] sm:$0xf]
        %v226 = vld [vmem:[%s177 + $0x4c] sm:$0xf]
        %v227 = vld [vmem:[%s177 + $0x50] sm:$0xf]
        %v228 = vld [vmem:[%s177 + $0x54] sm:$0xf]
        %v229 = vld [vmem:[%s177 + $0x58] sm:$0xf]
        %v230 = vld [vmem:[%s177 + $0x5c] sm:$0xf]
        %v231 = vld [vmem:[%s177 + $0x60] sm:$0xf]
        %v232 = vld [vmem:[%s177 + $0x64] sm:$0xf]
        %v233 = vld [vmem:[%s177 + $0x68] sm:$0xf]
        %v234 = vld [vmem:[%s177 + $0x6c] sm:$0xf]
        %v235 = vld [vmem:[%s177 + $0x70] sm:$0xf]
        %v236 = vld [vmem:[%s177 + $0x74] sm:$0xf]
        %v237 = vld [vmem:[%s177 + $0x78] sm:$0xf]
        %v238 = vld [vmem:[%s177 + $0x7c] sm:$0xf]
        %v239 = vld [vmem:[#allocation5] sm:$0xf]
        %v240 = vld [vmem:[#allocation5 + $0x4] sm:$0xf]
        %v241 = vld [vmem:[#allocation5 + $0x8] sm:$0xf]
        %v242 = vld [vmem:[#allocation5 + $0xc] sm:$0xf]
        %v243 = vld [vmem:[#allocation5 + $0x10] sm:$0xf]
        %v244 = vld [vmem:[#allocation5 + $0x14] sm:$0xf]
        %v245 = vld [vmem:[#allocation5 + $0x18] sm:$0xf]
        %v246 = vld [vmem:[#allocation5 + $0x1c] sm:$0xf]
        %v247 = vld [vmem:[#allocation5 + $0x20] sm:$0xf]
        %v248 = vld [vmem:[#allocation5 + $0x24] sm:$0xf]
        %v249 = vld [vmem:[#allocation5 + $0x28] sm:$0xf]
        %v250 = vld [vmem:[#allocation5 + $0x2c] sm:$0xf]
        %v251 = vld [vmem:[#allocation5 + $0x30] sm:$0xf]
        %v252 = vld [vmem:[#allocation5 + $0x34] sm:$0xf]
        %v253 = vld [vmem:[#allocation5 + $0x38] sm:$0xf]
        %v254 = vld [vmem:[#allocation5 + $0x3c] sm:$0xf]
        %v255 = vld [vmem:[%s2] sm:$0x1]
        %v257 = vlaneseq
        %v258 = vshrl.u32 %v257, 7
        %v259 = vsub.s32 0, %v258
        %v260 = vrot.slane %v255, %v259
        %v294 = vunpack.c.l.b16 %v207
        %v295 = vunpack.c.l.b16 %v208
        %v296 = vunpack.c.l.b16 %v209
        %v297 = vunpack.c.l.b16 %v210
        %v298 = vunpack.c.l.b16 %v211
        %v299 = vunpack.c.l.b16 %v212
        %v300 = vunpack.c.l.b16 %v213
        %v301 = vunpack.c.l.b16 %v214
        %v302 = vunpack.c.l.b16 %v215
        %v303 = vunpack.c.l.b16 %v216
        %v304 = vunpack.c.l.b16 %v217
        %v305 = vunpack.c.l.b16 %v218
        %v306 = vunpack.c.l.b16 %v219
        %v307 = vunpack.c.l.b16 %v220
        %v308 = vunpack.c.l.b16 %v221
        %v309 = vunpack.c.l.b16 %v222
        %v310 = vunpack.c.l.b16 %v223
        %v311 = vunpack.c.l.b16 %v224
        %v312 = vunpack.c.l.b16 %v225
        %v313 = vunpack.c.l.b16 %v226
        %v314 = vunpack.c.l.b16 %v227
        %v315 = vunpack.c.l.b16 %v228
        %v316 = vunpack.c.l.b16 %v229
        %v317 = vunpack.c.l.b16 %v230
        %v318 = vunpack.c.l.b16 %v231
        %v319 = vunpack.c.l.b16 %v232
        %v320 = vunpack.c.l.b16 %v233
        %v321 = vunpack.c.l.b16 %v234
        %v322 = vunpack.c.l.b16 %v235
        %v323 = vunpack.c.l.b16 %v236
        %v324 = vunpack.c.l.b16 %v237
        %v325 = vunpack.c.l.b16 %v238
        %v326 = vpack.c.b16 %v295, %v294
        %v327 = vpack.c.b16 %v297, %v296
        %v328 = vpack.c.b16 %v299, %v298
        %v329 = vpack.c.b16 %v301, %v300
        %v330 = vpack.c.b16 %v303, %v302
        %v331 = vpack.c.b16 %v305, %v304
        %v332 = vpack.c.b16 %v307, %v306
        %v333 = vpack.c.b16 %v309, %v308
        %v334 = vpack.c.b16 %v311, %v310
        %v335 = vpack.c.b16 %v313, %v312
        %v336 = vpack.c.b16 %v315, %v314
        %v337 = vpack.c.b16 %v317, %v316
        %v338 = vpack.c.b16 %v319, %v318
        %v339 = vpack.c.b16 %v321, %v320
        %v340 = vpack.c.b16 %v323, %v322
        %v341 = vpack.c.b16 %v325, %v324
        %v374 = vunpack.c.l.b16 %v239
        %v375 = vunpack.c.l.b16 %v240
        %v376 = vunpack.c.l.b16 %v241
        %v377 = vunpack.c.l.b16 %v242
        %v378 = vunpack.c.l.b16 %v243
        %v379 = vunpack.c.l.b16 %v244
        %v380 = vunpack.c.l.b16 %v245
        %v381 = vunpack.c.l.b16 %v246
        %v382 = vunpack.c.l.b16 %v247
        %v383 = vunpack.c.l.b16 %v248
        %v384 = vunpack.c.l.b16 %v249
        %v385 = vunpack.c.l.b16 %v250
        %v386 = vunpack.c.l.b16 %v251
        %v387 = vunpack.c.l.b16 %v252
        %v388 = vunpack.c.l.b16 %v253
        %v389 = vunpack.c.l.b16 %v254
        %v390 = vpack.c.b16 %v375, %v374
        %v391 = vpack.c.b16 %v377, %v376
        %v392 = vpack.c.b16 %v379, %v378
        %v393 = vpack.c.b16 %v381, %v380
        %v394 = vpack.c.b16 %v383, %v382
        %v395 = vpack.c.b16 %v385, %v384
        %v396 = vpack.c.b16 %v387, %v386
        %v397 = vpack.c.b16 %v389, %v388
        %406 = vmatprep.subr.bf16.mxu0 0
        %407 = vmatpush1.bf16.msra.mxu0 %v397
        %408 = vmatprep.subr.bf16.mxu0 0
        %409 = vmatpush1.bf16.msra.mxu0 %v396
        %410 = vmatprep.subr.bf16.mxu0 0
        %411 = vmatpush1.bf16.msra.mxu0 %v395
        %412 = vmatprep.subr.bf16.mxu0 0
        %413 = vmatpush1.bf16.msra.mxu0 %v394
        %414 = vmatprep.subr.bf16.mxu0 0
        %415 = vmatpush1.bf16.msra.mxu0 %v393
        %416 = vmatprep.subr.bf16.mxu0 0
        %417 = vmatpush1.bf16.msra.mxu0 %v392
        %418 = vmatprep.subr.bf16.mxu0 0
        %419 = vmatpush1.bf16.msra.mxu0 %v391
        %420 = vmatprep.subr.bf16.mxu0 0
        %421 = vmatpush1.bf16.msra.mxu0 %v390
        %422 = vmatprep.subr.bf16.mxu0 0
        %423 = vmatpush2.bf16.msra.mxu0 0
        %424 = vmatprep.subr.bf16.mxu0 0
        %425 = vmatpush2.bf16.msra.mxu0 0
        %426 = vmatprep.subr.bf16.mxu0 0
        %427 = vmatpush2.bf16.msra.mxu0 0
        %428 = vmatprep.subr.bf16.mxu0 0
        %429 = vmatpush2.bf16.msra.mxu0 0
        %430 = vmatprep.subr.bf16.mxu0 0
        %431 = vmatpush2.bf16.msra.mxu0 0
        %432 = vmatprep.subr.bf16.mxu0 0
        %433 = vmatpush2.bf16.msra.mxu0 0
        %434 = vmatprep.subr.bf16.mxu0 0
        %435 = vmatpush2.bf16.msra.mxu0 0
        %436 = vmatprep.subr.bf16.mxu0 0
        %437 = vmatpush2.bf16.msra.mxu0 0
        %438 = vmatprep.mubr.bf16.mxu0 0
        %439 = vmatmul.mubr.bf16.gmra.mxu0 %v326
        %v440 = vpop.f32.mrf.mxu0
        %v441 = vadd.f32 %v260, %v440
        %v442 = vpop.f32.mrf.mxu0
        %v443 = vpop.f32.mrf.mxu0
        %v444 = vadd.f32 %v260, %v443
        %v445 = vpop.f32.mrf.mxu0
        %446 = vmatprep.mubr.bf16.mxu0 0
        %447 = vmatmul.mubr.bf16.gmra.mxu0 %v327
        %v448 = vpop.f32.mrf.mxu0
        %v449 = vadd.f32 %v260, %v448
        %v450 = vpop.f32.mrf.mxu0
        %v451 = vpop.f32.mrf.mxu0
        %v452 = vadd.f32 %v260, %v451
        %v453 = vpop.f32.mrf.mxu0
        %454 = vmatprep.mubr.bf16.mxu0 0
        %455 = vmatmul.mubr.bf16.gmra.mxu0 %v328
        %v456 = vpop.f32.mrf.mxu0
        %v457 = vadd.f32 %v260, %v456
        %v458 = vpop.f32.mrf.mxu0
        %v459 = vpop.f32.mrf.mxu0
        %v460 = vadd.f32 %v260, %v459
        %v461 = vpop.f32.mrf.mxu0
        %462 = vmatprep.mubr.bf16.mxu0 0
        %463 = vmatmul.mubr.bf16.gmra.mxu0 %v329
        %v464 = vpop.f32.mrf.mxu0
        %v465 = vadd.f32 %v260, %v464
        %v466 = vpop.f32.mrf.mxu0
        %v467 = vpop.f32.mrf.mxu0
        %v468 = vadd.f32 %v260, %v467
        %v469 = vpop.f32.mrf.mxu0
        %470 = vmatprep.mubr.bf16.mxu0 0
        %471 = vmatmul.mubr.bf16.gmra.mxu0 %v330
        %v472 = vpop.f32.mrf.mxu0
        %v473 = vadd.f32 %v260, %v472
        %v474 = vpop.f32.mrf.mxu0
        %v475 = vpop.f32.mrf.mxu0
        %v476 = vadd.f32 %v260, %v475
        %v477 = vpop.f32.mrf.mxu0
        %478 = vmatprep.mubr.bf16.mxu0 0
        %479 = vmatmul.mubr.bf16.gmra.mxu0 %v331
        %v480 = vpop.f32.mrf.mxu0
        %v481 = vadd.f32 %v260, %v480
        %v482 = vpop.f32.mrf.mxu0
        %v483 = vpop.f32.mrf.mxu0
        %v484 = vadd.f32 %v260, %v483
        %v485 = vpop.f32.mrf.mxu0
        %486 = vmatprep.mubr.bf16.mxu0 0
        %487 = vmatmul.mubr.bf16.gmra.mxu0 %v332
        %v488 = vpop.f32.mrf.mxu0
        %v489 = vadd.f32 %v260, %v488
        %v490 = vpop.f32.mrf.mxu0
        %v491 = vpop.f32.mrf.mxu0
        %v492 = vadd.f32 %v260, %v491
        %v493 = vpop.f32.mrf.mxu0
        %494 = vmatprep.mubr.bf16.mxu0 0
        %495 = vmatmul.mubr.bf16.gmra.mxu0 %v333
        %v496 = vpop.f32.mrf.mxu0
        %v497 = vadd.f32 %v260, %v496
        %v498 = vpop.f32.mrf.mxu0
        %v499 = vpop.f32.mrf.mxu0
        %v500 = vadd.f32 %v260, %v499
        %v501 = vpop.f32.mrf.mxu0
        %502 = vmatprep.mubr.bf16.mxu0 0
        %503 = vmatmul.mubr.bf16.gmra.mxu0 %v334
        %v504 = vpop.f32.mrf.mxu0
        %v505 = vadd.f32 %v260, %v504
        %v506 = vpop.f32.mrf.mxu0
        %v507 = vpop.f32.mrf.mxu0
        %v508 = vadd.f32 %v260, %v507
        %v509 = vpop.f32.mrf.mxu0
        %510 = vmatprep.mubr.bf16.mxu0 0
        %511 = vmatmul.mubr.bf16.gmra.mxu0 %v335
        %v512 = vpop.f32.mrf.mxu0
        %v513 = vadd.f32 %v260, %v512
        %v514 = vpop.f32.mrf.mxu0
        %v515 = vpop.f32.mrf.mxu0
        %v516 = vadd.f32 %v260, %v515
        %v517 = vpop.f32.mrf.mxu0
        %518 = vmatprep.mubr.bf16.mxu0 0
        %519 = vmatmul.mubr.bf16.gmra.mxu0 %v336
        %v520 = vpop.f32.mrf.mxu0
        %v521 = vadd.f32 %v260, %v520
        %v522 = vpop.f32.mrf.mxu0
        %v523 = vpop.f32.mrf.mxu0
        %v524 = vadd.f32 %v260, %v523
        %v525 = vpop.f32.mrf.mxu0
        %526 = vmatprep.mubr.bf16.mxu0 0
        %527 = vmatmul.mubr.bf16.gmra.mxu0 %v337
        %v528 = vpop.f32.mrf.mxu0
        %v529 = vadd.f32 %v260, %v528
        %v530 = vpop.f32.mrf.mxu0
        %v531 = vpop.f32.mrf.mxu0
        %v532 = vadd.f32 %v260, %v531
        %v533 = vpop.f32.mrf.mxu0
        %534 = vmatprep.mubr.bf16.mxu0 0
        %535 = vmatmul.mubr.bf16.gmra.mxu0 %v338
        %v536 = vpop.f32.mrf.mxu0
        %v537 = vadd.f32 %v260, %v536
        %v538 = vpop.f32.mrf.mxu0
        %v539 = vpop.f32.mrf.mxu0
        %v540 = vadd.f32 %v260, %v539
        %v541 = vpop.f32.mrf.mxu0
        %542 = vmatprep.mubr.bf16.mxu0 0
        %543 = vmatmul.mubr.bf16.gmra.mxu0 %v339
        %v544 = vpop.f32.mrf.mxu0
        %v545 = vadd.f32 %v260, %v544
        %v546 = vpop.f32.mrf.mxu0
        %v547 = vpop.f32.mrf.mxu0
        %v548 = vadd.f32 %v260, %v547
        %v549 = vpop.f32.mrf.mxu0
        %550 = vmatprep.mubr.bf16.mxu0 0
        %551 = vmatmul.mubr.bf16.gmra.mxu0 %v340
        %v552 = vpop.f32.mrf.mxu0
        %v553 = vadd.f32 %v260, %v552
        %v554 = vpop.f32.mrf.mxu0
        %v555 = vpop.f32.mrf.mxu0
        %v556 = vadd.f32 %v260, %v555
        %v557 = vpop.f32.mrf.mxu0
        %558 = vmatprep.mubr.bf16.mxu0 0
        %559 = vmatmul.mubr.bf16.gmra.mxu0 %v341
        %v560 = vpop.f32.mrf.mxu0
        %v561 = vadd.f32 %v260, %v560
        %v562 = vpop.f32.mrf.mxu0
        %v563 = vpop.f32.mrf.mxu0
        %v564 = vadd.f32 %v260, %v563
        %v565 = vpop.f32.mrf.mxu0
        %566 = vdwg.mxu0
        %v567 = vmax.f32 %v441, 0.0
        %v568 = vmax.f32 %v444, 0.0
        %v569 = vmax.f32 %v449, 0.0
        %v570 = vmax.f32 %v452, 0.0
        %v571 = vmax.f32 %v457, 0.0
        %v572 = vmax.f32 %v460, 0.0
        %v573 = vmax.f32 %v465, 0.0
        %v574 = vmax.f32 %v468, 0.0
        %v575 = vmax.f32 %v473, 0.0
        %v576 = vmax.f32 %v476, 0.0
        %v577 = vmax.f32 %v481, 0.0
        %v578 = vmax.f32 %v484, 0.0
        %v579 = vmax.f32 %v489, 0.0
        %v580 = vmax.f32 %v492, 0.0
        %v581 = vmax.f32 %v497, 0.0
        %v582 = vmax.f32 %v500, 0.0
        %v583 = vmax.f32 %v505, 0.0
        %v584 = vmax.f32 %v508, 0.0
        %v585 = vmax.f32 %v513, 0.0
        %v586 = vmax.f32 %v516, 0.0
        %v587 = vmax.f32 %v521, 0.0
        %v588 = vmax.f32 %v524, 0.0
        %v589 = vmax.f32 %v529, 0.0
        %v590 = vmax.f32 %v532, 0.0
        %v591 = vmax.f32 %v537, 0.0
        %v592 = vmax.f32 %v540, 0.0
        %v593 = vmax.f32 %v545, 0.0
        %v594 = vmax.f32 %v548, 0.0
        %v595 = vmax.f32 %v553, 0.0
        %v596 = vmax.f32 %v556, 0.0
        %v597 = vmax.f32 %v561, 0.0
        %v598 = vmax.f32 %v564, 0.0
        %v599 = vunpack.c.l.bf16 %v207
        %v600 = vunpack.c.l.bf16 %v208
        %v601 = vunpack.c.l.bf16 %v209
        %v602 = vunpack.c.l.bf16 %v210
        %v603 = vunpack.c.l.bf16 %v211
        %v604 = vunpack.c.l.bf16 %v212
        %v605 = vunpack.c.l.bf16 %v213
        %v606 = vunpack.c.l.bf16 %v214
        %v607 = vunpack.c.l.bf16 %v215
        %v608 = vunpack.c.l.bf16 %v216
        %v609 = vunpack.c.l.bf16 %v217
        %v610 = vunpack.c.l.bf16 %v218
        %v611 = vunpack.c.l.bf16 %v219
        %v612 = vunpack.c.l.bf16 %v220
        %v613 = vunpack.c.l.bf16 %v221
        %v614 = vunpack.c.l.bf16 %v222
        %v615 = vunpack.c.l.bf16 %v223
        %v616 = vunpack.c.l.bf16 %v224
        %v617 = vunpack.c.l.bf16 %v225
        %v618 = vunpack.c.l.bf16 %v226
        %v619 = vunpack.c.l.bf16 %v227
        %v620 = vunpack.c.l.bf16 %v228
        %v621 = vunpack.c.l.bf16 %v229
        %v622 = vunpack.c.l.bf16 %v230
        %v623 = vunpack.c.l.bf16 %v231
        %v624 = vunpack.c.l.bf16 %v232
        %v625 = vunpack.c.l.bf16 %v233
        %v626 = vunpack.c.l.bf16 %v234
        %v627 = vunpack.c.l.bf16 %v235
        %v628 = vunpack.c.l.bf16 %v236
        %v629 = vunpack.c.l.bf16 %v237
        %v630 = vunpack.c.l.bf16 %v238
        %v631 = vadd.f32 %v567, %v599
        %v632 = vadd.f32 %v568, %v600
        %v633 = vadd.f32 %v569, %v601
        %v634 = vadd.f32 %v570, %v602
        %v635 = vadd.f32 %v571, %v603
        %v636 = vadd.f32 %v572, %v604
        %v637 = vadd.f32 %v573, %v605
        %v638 = vadd.f32 %v574, %v606
        %v639 = vadd.f32 %v575, %v607
        %v640 = vadd.f32 %v576, %v608
        %v641 = vadd.f32 %v577, %v609
        %v642 = vadd.f32 %v578, %v610
        %v643 = vadd.f32 %v579, %v611
        %v644 = vadd.f32 %v580, %v612
        %v645 = vadd.f32 %v581, %v613
        %v646 = vadd.f32 %v582, %v614
        %v647 = vadd.f32 %v583, %v615
        %v648 = vadd.f32 %v584, %v616
        %v649 = vadd.f32 %v585, %v617
        %v650 = vadd.f32 %v586, %v618
        %v651 = vadd.f32 %v587, %v619
        %v652 = vadd.f32 %v588, %v620
        %v653 = vadd.f32 %v589, %v621
        %v654 = vadd.f32 %v590, %v622
        %v655 = vadd.f32 %v591, %v623
        %v656 = vadd.f32 %v592, %v624
        %v657 = vadd.f32 %v593, %v625
        %v658 = vadd.f32 %v594, %v626
        %v659 = vadd.f32 %v595, %v627
        %v660 = vadd.f32 %v596, %v628
        %v661 = vadd.f32 %v597, %v629
        %v662 = vadd.f32 %v598, %v630
        %v663 = vmax.f32 %v631, 0.0
        %v664 = vmax.f32 %v632, 0.0
        %v665 = vmax.f32 %v633, 0.0
        %v666 = vmax.f32 %v634, 0.0
        %v667 = vmax.f32 %v635, 0.0
        %v668 = vmax.f32 %v636, 0.0
        %v669 = vmax.f32 %v637, 0.0
        %v670 = vmax.f32 %v638, 0.0
        %v671 = vmax.f32 %v639, 0.0
        %v672 = vmax.f32 %v640, 0.0
        %v673 = vmax.f32 %v641, 0.0
        %v674 = vmax.f32 %v642, 0.0
        %v675 = vmax.f32 %v643, 0.0
        %v676 = vmax.f32 %v644, 0.0
        %v677 = vmax.f32 %v645, 0.0
        %v678 = vmax.f32 %v646, 0.0
        %v679 = vmax.f32 %v647, 0.0
        %v680 = vmax.f32 %v648, 0.0
        %v681 = vmax.f32 %v649, 0.0
        %v682 = vmax.f32 %v650, 0.0
        %v683 = vmax.f32 %v651, 0.0
        %v684 = vmax.f32 %v652, 0.0
        %v685 = vmax.f32 %v653, 0.0
        %v686 = vmax.f32 %v654, 0.0
        %v687 = vmax.f32 %v655, 0.0
        %v688 = vmax.f32 %v656, 0.0
        %v689 = vmax.f32 %v657, 0.0
        %v690 = vmax.f32 %v658, 0.0
        %v691 = vmax.f32 %v659, 0.0
        %v692 = vmax.f32 %v660, 0.0
        %v693 = vmax.f32 %v661, 0.0
        %v694 = vmax.f32 %v662, 0.0
        %v695 = vpack.c.bf16 %v664, %v663
        %v696 = vpack.c.bf16 %v666, %v665
        %v697 = vpack.c.bf16 %v668, %v667
        %v698 = vpack.c.bf16 %v670, %v669
        %v699 = vpack.c.bf16 %v672, %v671
        %v700 = vpack.c.bf16 %v674, %v673
        %v701 = vpack.c.bf16 %v676, %v675
        %v702 = vpack.c.bf16 %v678, %v677
        %v703 = vpack.c.bf16 %v680, %v679
        %v704 = vpack.c.bf16 %v682, %v681
        %v705 = vpack.c.bf16 %v684, %v683
        %v706 = vpack.c.bf16 %v686, %v685
        %v707 = vpack.c.bf16 %v688, %v687
        %v708 = vpack.c.bf16 %v690, %v689
        %v709 = vpack.c.bf16 %v692, %v691
        %v710 = vpack.c.bf16 %v694, %v693
        %v727 = vunpack.c.l.b16 %v695
        %v728 = vunpack.c.h.b16 %v695
        %v729 = vunpack.c.l.b16 %v696
        %v730 = vunpack.c.h.b16 %v696
        %v731 = vunpack.c.l.b16 %v697
        %v732 = vunpack.c.h.b16 %v697
        %v733 = vunpack.c.l.b16 %v698
        %v734 = vunpack.c.h.b16 %v698
        %v735 = vunpack.c.l.b16 %v699
        %v736 = vunpack.c.h.b16 %v699
        %v737 = vunpack.c.l.b16 %v700
        %v738 = vunpack.c.h.b16 %v700
        %v739 = vunpack.c.l.b16 %v701
        %v740 = vunpack.c.h.b16 %v701
        %v741 = vunpack.c.l.b16 %v702
        %v742 = vunpack.c.h.b16 %v702
        %v743 = vunpack.c.l.b16 %v703
        %v744 = vunpack.c.h.b16 %v703
        %v745 = vunpack.c.l.b16 %v704
        %v746 = vunpack.c.h.b16 %v704
        %v747 = vunpack.c.l.b16 %v705
        %v748 = vunpack.c.h.b16 %v705
        %v749 = vunpack.c.l.b16 %v706
        %v750 = vunpack.c.h.b16 %v706
        %v751 = vunpack.c.l.b16 %v707
        %v752 = vunpack.c.h.b16 %v707
        %v753 = vunpack.c.l.b16 %v708
        %v754 = vunpack.c.h.b16 %v708
        %v755 = vunpack.c.l.b16 %v709
        %v756 = vunpack.c.h.b16 %v709
        %v757 = vunpack.c.l.b16 %v710
        %v758 = vunpack.c.h.b16 %v710
        %v759 = vpack.c.b16 %v727, %v727
        %v760 = vpack.c.b16 %v728, %v728
        %v761 = vpack.c.b16 %v729, %v729
        %v762 = vpack.c.b16 %v730, %v730
        %v763 = vpack.c.b16 %v731, %v731
        %v764 = vpack.c.b16 %v732, %v732
        %v765 = vpack.c.b16 %v733, %v733
        %v766 = vpack.c.b16 %v734, %v734
        %v767 = vpack.c.b16 %v735, %v735
        %v768 = vpack.c.b16 %v736, %v736
        %v769 = vpack.c.b16 %v737, %v737
        %v770 = vpack.c.b16 %v738, %v738
        %v771 = vpack.c.b16 %v739, %v739
        %v772 = vpack.c.b16 %v740, %v740
        %v773 = vpack.c.b16 %v741, %v741
        %v774 = vpack.c.b16 %v742, %v742
        %v775 = vpack.c.b16 %v743, %v743
        %v776 = vpack.c.b16 %v744, %v744
        %v777 = vpack.c.b16 %v745, %v745
        %v778 = vpack.c.b16 %v746, %v746
        %v779 = vpack.c.b16 %v747, %v747
        %v780 = vpack.c.b16 %v748, %v748
        %v781 = vpack.c.b16 %v749, %v749
        %v782 = vpack.c.b16 %v750, %v750
        %v783 = vpack.c.b16 %v751, %v751
        %v784 = vpack.c.b16 %v752, %v752
        %v785 = vpack.c.b16 %v753, %v753
        %v786 = vpack.c.b16 %v754, %v754
        %v787 = vpack.c.b16 %v755, %v755
        %v788 = vpack.c.b16 %v756, %v756
        %v789 = vpack.c.b16 %v757, %v757
        %v790 = vpack.c.b16 %v758, %v758
        %823 = vst [vmem:[%s203] sm:$0xf] %v759
        %824 = vst [vmem:[%s203 + $0x4] sm:$0xf] %v760
        %825 = vst [vmem:[%s203 + $0x8] sm:$0xf] %v761
        %826 = vst [vmem:[%s203 + $0xc] sm:$0xf] %v762
        %827 = vst [vmem:[%s203 + $0x10] sm:$0xf] %v763
        %828 = vst [vmem:[%s203 + $0x14] sm:$0xf] %v764
        %829 = vst [vmem:[%s203 + $0x18] sm:$0xf] %v765
        %830 = vst [vmem:[%s203 + $0x1c] sm:$0xf] %v766
        %831 = vst [vmem:[%s203 + $0x20] sm:$0xf] %v767
        %832 = vst [vmem:[%s203 + $0x24] sm:$0xf] %v768
        %833 = vst [vmem:[%s203 + $0x28] sm:$0xf] %v769
        %834 = vst [vmem:[%s203 + $0x2c] sm:$0xf] %v770
        %835 = vst [vmem:[%s203 + $0x30] sm:$0xf] %v771
        %836 = vst [vmem:[%s203 + $0x34] sm:$0xf] %v772
        %837 = vst [vmem:[%s203 + $0x38] sm:$0xf] %v773
        %838 = vst [vmem:[%s203 + $0x3c] sm:$0xf] %v774
        %839 = vst [vmem:[%s203 + $0x40] sm:$0xf] %v775
        %840 = vst [vmem:[%s203 + $0x44] sm:$0xf] %v776
        %841 = vst [vmem:[%s203 + $0x48] sm:$0xf] %v777
        %842 = vst [vmem:[%s203 + $0x4c] sm:$0xf] %v778
        %843 = vst [vmem:[%s203 + $0x50] sm:$0xf] %v779
        %844 = vst [vmem:[%s203 + $0x54] sm:$0xf] %v780
        %845 = vst [vmem:[%s203 + $0x58] sm:$0xf] %v781
        %846 = vst [vmem:[%s203 + $0x5c] sm:$0xf] %v782
        %847 = vst [vmem:[%s203 + $0x60] sm:$0xf] %v783
        %848 = vst [vmem:[%s203 + $0x64] sm:$0xf] %v784
        %849 = vst [vmem:[%s203 + $0x68] sm:$0xf] %v785
        %850 = vst [vmem:[%s203 + $0x6c] sm:$0xf] %v786
        %851 = vst [vmem:[%s203 + $0x70] sm:$0xf] %v787
        %852 = vst [vmem:[%s203 + $0x74] sm:$0xf] %v788
        %853 = vst [vmem:[%s203 + $0x78] sm:$0xf] %v789
        %854 = vst [vmem:[%s203 + $0x7c] sm:$0xf] %v790
        %s855 = sand.u32 %s97, 1
        %s856 = scalar_lea.sflag [#allocation4], %s855
        %s857 = sand.u32 %s97, 1
        %s858 = smul.addr %s857, 128
        %s859 = scalar_lea.vmem [#allocation7], %s858
        // Predicated region
        $region41: #{tpu_custom_call.1} parent=31 // pred_check
          %p860 = pneg %p107
        $region42: #{tpu_custom_call.1} parent=31 // pred_check_branch
          %862 = sbr.rel (%p860) target = $region44
        $region43: #{tpu_custom_call.1} parent=31 // pred_region
          %s863 = smul.u32 32, %s21
          %s865 = ssub.s32 2048, 2048
          %866 = vsyncadd %s856, %s865
          %s867 = smul.addr %s863, 64
          %s868 = scalar_lea.hbm %s3, %s867
          %s869 = sshll.u32 %s859, 4
          %s870 = int_to_ptr.vmem [resolvable:$true] %s869
          %875 = dma.vmem_to_hbm [thread:$0]  %s870, 2048, %s868, %s856, 64, 64, 4
        $region44: #{tpu_custom_call.1} parent=31 // pred_fallthru
          _
      $region32: #{tpu_custom_call.1} parent=5 // pred_fallthru
        _
      %p876 = scmp.le.s32.totalorder 2, %s16
      // Predicated region
      $region45: #{tpu_custom_call.1} parent=5 // pred_check
        %p877 = pneg %p876
      $region46: #{tpu_custom_call.1} parent=5 // pred_check_branch
        %879 = sbr.rel (%p877) target = $region48
      $region47: #{tpu_custom_call.1} parent=5 // pred_region
        %s880 = ssub.s32 %s16, 2
        // Predicated region
        $region49: #{tpu_custom_call.1} parent=47 // pred_check
          %p881 = pneg %p113
        $region50: #{tpu_custom_call.1} parent=47 // pred_check_branch
          %883 = sbr.rel (%p881) target = $region52
        $region51: #{tpu_custom_call.1} parent=47 // pred_region
          %s884 = sand.u32 %s98, 1
          %s885 = scalar_lea.sflag [#allocation4], %s884
          %s886 = sand.u32 %s98, 1
          %s887 = smul.addr %s886, 128
          %s888 = scalar_lea.vmem [#allocation7], %s887
          %889 = dma.done %s885, 2048
        $region52: #{tpu_custom_call.1} parent=47 // pred_fallthru
          _
      $region48: #{tpu_custom_call.1} parent=5 // pred_fallthru
        _
    $region6: #{tpu_custom_call.1} parent=1 // loop_footer
      %s20 = sadd.s32 1, %s16
    $region7: #{tpu_custom_call.1} parent=1 // loop_footer_branch
      %15 = sbr.rel target = $region3
    $region8: #{tpu_custom_call.1} parent=1 // loop_exit
      _
    %890 = vsyncpa [#allocation3], 1
    %s891 = scalar_lea.sflag [#allocation3], 1
    %892 = vsyncpa %s891, 1
    %893 = vsyncpa [#allocation6], 1
    %894 = vsyncpa [#allocation4], 1
    %s895 = scalar_lea.sflag [#allocation4], 1
    %896 = vsyncpa %s895, 1

</llo_original>
